<compile_context>
chip_gen: v6e
topology: v6e:2x2x1
jax: 0.10.0
libtpu: 0.0.40
codegen_flags: <defaults>
</compile_context>

<pallas_src>
import jax
import jax.numpy as jnp
from jax.experimental import pallas as pl
from jax.experimental.pallas import tpu as pltpu


def _round_up(x, m):
    return (x + m - 1) // m * m


# --------------------------------------------------------------------------
# Fused two-layer HeteroGraphConv kernel (single invocation, VMEM resident)
# --------------------------------------------------------------------------
def _hetero_gnn_fused_kernel(a_ref, x_ref, w1_ref, b1_ref, w2_ref, b2_ref,
                             o_ref):
    n_etypes = a_ref.shape[0]          # static
    n_p = x_ref.shape[0]               # nodes, padded to a multiple of 128
    fh_p = w1_ref.shape[2]
    fc_p = o_ref.shape[1]

    x = x_ref[...]                     # (Np, Fi_p)

    # ---- Layer 1: sum_e A[e] @ (X @ W1[e]) + sum_e b1[e], fused ReLU.
    # Each per-etype matmul is lane-dense (K = Np or Fi_p, multiples of 128).
    acc1 = jnp.zeros((n_p, fh_p), jnp.float32)
    for e in range(n_etypes):          # static, unrolled (E is small)
        xw = jnp.dot(x, w1_ref[e], preferred_element_type=jnp.float32)
        acc1 = acc1 + jnp.dot(a_ref[e], xw, preferred_element_type=jnp.float32)
    h = jnp.maximum(acc1 + b1_ref[...], 0.0)

    # NOTE (padding invariant): padded dst rows of `h` hold ReLU(sum_e b1)
    # garbage, but the corresponding zero source-columns of A[e] kill their
    # contribution in layer 2, and the wrapper slices them off at the end.
    # Any future tiling change must preserve this.

    # ---- Layer 2 on the VMEM-resident hidden activation.
    acc2 = jnp.zeros((n_p, fc_p), jnp.float32)
    for e in range(n_etypes):
        hw = jnp.dot(h, w2_ref[e], preferred_element_type=jnp.float32)
        acc2 = acc2 + jnp.dot(a_ref[e], hw, preferred_element_type=jnp.float32)
    o_ref[...] = (acc2 + b2_ref[...]).astype(o_ref.dtype)


# --------------------------------------------------------------------------
# DGL GraphConv 'both' normalization of the dense adjacency (pure JAX)
# --------------------------------------------------------------------------
def normalize_adj_both(a):
    """a: (E, N_dst, N_src) 0/1 adjacency -> D_in^{-1/2} A D_out^{-1/2}."""
    deg_in = a.sum(axis=2)    # (E, N) destination in-degree
    deg_out = a.sum(axis=1)   # (E, N) source out-degree
    din = jnp.where(deg_in > 0, jax.lax.rsqrt(deg_in), 0.0)
    dout = jnp.where(deg_out > 0, jax.lax.rsqrt(deg_out), 0.0)
    return a * din[:, :, None] * dout[:, None, :]


# --------------------------------------------------------------------------
# Jitted forward: normalize + pad + fused kernel under one XLA program
# --------------------------------------------------------------------------
@jax.jit
def hetero_gnn_forward(adj, x, w1, b1, w2, b2):
    """HeteroGraphConv(sum) x2 of GraphConv(norm='both', bias=True).

    adj: (E, N, N) 0/1 dense adjacency per edge type, (dst, src)
    x:   (N, F_in) node features (single node type)
    w1/b1: (E, F_in, F_h) / (E, F_h);  w2/b2: (E, F_h, F_c) / (E, F_c)
    returns (N, F_c)
    """
    E, N, _ = adj.shape
    f_in, f_h = w1.shape[1], w1.shape[2]
    f_c = w2.shape[2]

    a_norm = normalize_adj_both(adj)

    # Pad nodes AND features to multiples of 128: lane-dense loads/stores and
    # 128-aligned MXU contraction axes everywhere.
    n_pad = _round_up(N, 128)
    fi_p, fh_p, fc_p = (_round_up(f, 128) for f in (f_in, f_h, f_c))

    a_p = jnp.zeros((E, n_pad, n_pad), jnp.float32).at[:, :N, :N].set(a_norm)
    x_p = jnp.zeros((n_pad, fi_p), jnp.float32).at[:N, :f_in].set(x)
    w1_p = jnp.zeros((E, fi_p, fh_p), jnp.float32).at[:, :f_in, :f_h].set(w1)
    w2_p = jnp.zeros((E, fh_p, fc_p), jnp.float32).at[:, :f_h, :f_c].set(w2)
    # aggregate='sum' adds every per-etype GraphConv bias -> pre-sum once.
    b1_sum = jnp.zeros((1, fh_p), jnp.float32).at[0, :f_h].set(b1.sum(axis=0))
    b2_sum = jnp.zeros((1, fc_p), jnp.float32).at[0, :f_c].set(b2.sum(axis=0))

    flops = 2 * E * (n_pad * fi_p * fh_p + n_pad * n_pad * fh_p
                     + n_pad * fh_p * fc_p + n_pad * n_pad * fc_p)
    bytes_accessed = 4 * (E * n_pad * n_pad + n_pad * fi_p
                          + E * fi_p * fh_p + fh_p
                          + E * fh_p * fc_p + fc_p
                          + n_pad * fc_p)

    vmem_spec = pl.BlockSpec(memory_space=pltpu.MemorySpace.VMEM)

    out_p = pl.pallas_call(
        _hetero_gnn_fused_kernel,
        out_shape=jax.ShapeDtypeStruct((n_pad, fc_p), jnp.float32),
        # No grid: single invocation, whole (padded) operands VMEM-resident,
        # single-buffered (no pointless double-buffering at one step).
        in_specs=[vmem_spec] * 6,
        out_specs=vmem_spec,
        compiler_params=pltpu.CompilerParams(
            vmem_limit_bytes=64 * 1024 * 1024),
        cost_estimate=pl.CostEstimate(
            flops=flops, transcendentals=0, bytes_accessed=bytes_accessed),
    )(a_p, x_p, w1_p, b1_sum, w2_p, b2_sum)

    return out_p[:N, :f_c]


# --------------------------------------------------------------------------
# Model wrapper reproducing HeteroGNN.forward
# --------------------------------------------------------------------------
class HeteroGNNPallas:
    def __init__(self, in_feats, h_feats, num_classes, etypes, key):
        self.etypes = list(etypes)
        E = len(self.etypes)
        k = jax.random.split(key, 2)
        lim1 = (6.0 / (in_feats + h_feats)) ** 0.5
        lim2 = (6.0 / (h_feats + num_classes)) ** 0.5
        self.w1 = jax.random.uniform(k[0], (E, in_feats, h_feats),
                                     jnp.float32, -lim1, lim1)
        self.b1 = (jnp.zeros((E, h_feats), jnp.float32)
                   + 0.01 * jnp.arange(E, dtype=jnp.float32)[:, None])
        self.w2 = jax.random.uniform(k[1], (E, h_feats, num_classes),
                                     jnp.float32, -lim2, lim2)
        self.b2 = jnp.zeros((E, num_classes), jnp.float32)

    def forward(self, adj, inputs):
        # inputs: {"node": X}; single node type, E edge types among it.
        x = inputs["node"]
        out = hetero_gnn_forward(adj, x, self.w1, self.b1, self.w2, self.b2)
        return {"node": out}


# --------------------------------------------------------------------------
# Pure-JAX reference for correctness
# --------------------------------------------------------------------------
def reference_forward(adj, x, w1, b1, w2, b2):
    a_norm = normalize_adj_both(adj)
    hp = jax.lax.Precision.HIGHEST

    def layer(a, feats, w, b):
        msg = jnp.einsum("enm,mf,efg->eng", a, feats, w, precision=hp)
        return jnp.sum(msg + b[:, None, :], axis=0)

    h = jnp.maximum(layer(a_norm, x, w1, b1), 0.0)
    return layer(a_norm, h, w2, b2)


if __name__ == "__main__":
    key = jax.random.PRNGKey(0)
    k_adj, k_feat, k_param = jax.random.split(key, 3)

    # Small synthetic heterograph: 1 node type (N nodes), 3 edge types.
    N = 16
    in_feats, h_feats, num_classes = 8, 16, 8
    etypes = ("follows", "cites", "likes")
    E = len(etypes)

    # Dense 0/1 adjacency per edge type, with self-loops so no zero degrees.
    adj = (jax.random.uniform(k_adj, (E, N, N)) < 0.3).astype(jnp.float32)
    adj = jnp.maximum(adj, jnp.eye(N, dtype=jnp.float32)[None])

    x = jax.random.normal(k_feat, (N, in_feats), jnp.float32)
    inputs = {"node": x}

    model = HeteroGNNPallas(in_feats, h_feats, num_classes, etypes, k_param)
    out = model.forward(adj, inputs)
    jax.block_until_ready(out["node"])

    ref = reference_forward(adj, x, model.w1, model.b1, model.w2, model.b2)
    assert out["node"].shape == (N, num_classes)
    assert jnp.allclose(out["node"], ref, atol=1e-3, rtol=1e-3), (
        float(jnp.max(jnp.abs(out["node"] - ref))))

    print("KERNEL_OK")
</pallas_src>

<mosaic_0001>
module attributes {stable_mosaic.version = 11 : i64} {
  func.func @_hetero_gnn_fused_kernel(%arg0: memref<3x128x128xf32, #tpu.memory_space<vmem>>, %arg1: memref<128x128xf32, #tpu.memory_space<vmem>>, %arg2: memref<3x128x128xf32, #tpu.memory_space<vmem>>, %arg3: memref<1x128xf32, #tpu.memory_space<vmem>>, %arg4: memref<3x128x128xf32, #tpu.memory_space<vmem>>, %arg5: memref<1x128xf32, #tpu.memory_space<vmem>>, %arg6: memref<128x128xf32, #tpu.memory_space<vmem>>) attributes {dimension_semantics = [], scalar_prefetch = 0 : i64, scratch_operands = 0 : i64, tpu.core_type = #tpu.core_type<tc>} {
    %c0 = arith.constant 0 : index
    %c0_0 = arith.constant 0 : index
    %0 = vector.load %arg1[%c0, %c0_0] : memref<128x128xf32, #tpu.memory_space<vmem>>, vector<128x128xf32>
    %cst = arith.constant 0.000000e+00 : f32
    %1 = vector.broadcast %cst : f32 to vector<128x128xf32>
    %c0_1 = arith.constant 0 : index
    %c0_2 = arith.constant 0 : index
    %c0_3 = arith.constant 0 : index
    %2 = vector.load %arg2[%c0_1, %c0_2, %c0_3] : memref<3x128x128xf32, #tpu.memory_space<vmem>>, vector<1x128x128xf32>
    %3 = vector.shape_cast %2 : vector<1x128x128xf32> to vector<128x128xf32>
    %cst_4 = arith.constant dense<0.000000e+00> : vector<128x128xf32>
    %4 = tpu.matmul %0, %3, %cst_4 {dimension_numbers = #tpu.dot_dimension_numbers<[1], [0], [0], [1], [0, 0, 1, 1], [], []>} : vector<128x128xf32>, vector<128x128xf32>, vector<128x128xf32> -> vector<128x128xf32>
    %c0_5 = arith.constant 0 : index
    %c0_6 = arith.constant 0 : index
    %c0_7 = arith.constant 0 : index
    %5 = vector.load %arg0[%c0_5, %c0_6, %c0_7] : memref<3x128x128xf32, #tpu.memory_space<vmem>>, vector<1x128x128xf32>
    %6 = vector.shape_cast %5 : vector<1x128x128xf32> to vector<128x128xf32>
    %cst_8 = arith.constant dense<0.000000e+00> : vector<128x128xf32>
    %7 = tpu.matmul %6, %4, %cst_8 {dimension_numbers = #tpu.dot_dimension_numbers<[1], [0], [0], [1], [0, 0, 1, 1], [], []>} : vector<128x128xf32>, vector<128x128xf32>, vector<128x128xf32> -> vector<128x128xf32>
    %8 = arith.addf %1, %7 : vector<128x128xf32>
    %c1 = arith.constant 1 : index
    %c0_9 = arith.constant 0 : index
    %c0_10 = arith.constant 0 : index
    %9 = vector.load %arg2[%c1, %c0_9, %c0_10] : memref<3x128x128xf32, #tpu.memory_space<vmem>>, vector<1x128x128xf32>
    %10 = vector.shape_cast %9 : vector<1x128x128xf32> to vector<128x128xf32>
    %cst_11 = arith.constant dense<0.000000e+00> : vector<128x128xf32>
    %11 = tpu.matmul %0, %10, %cst_11 {dimension_numbers = #tpu.dot_dimension_numbers<[1], [0], [0], [1], [0, 0, 1, 1], [], []>} : vector<128x128xf32>, vector<128x128xf32>, vector<128x128xf32> -> vector<128x128xf32>
    %c1_12 = arith.constant 1 : index
    %c0_13 = arith.constant 0 : index
    %c0_14 = arith.constant 0 : index
    %12 = vector.load %arg0[%c1_12, %c0_13, %c0_14] : memref<3x128x128xf32, #tpu.memory_space<vmem>>, vector<1x128x128xf32>
    %13 = vector.shape_cast %12 : vector<1x128x128xf32> to vector<128x128xf32>
    %cst_15 = arith.constant dense<0.000000e+00> : vector<128x128xf32>
    %14 = tpu.matmul %13, %11, %cst_15 {dimension_numbers = #tpu.dot_dimension_numbers<[1], [0], [0], [1], [0, 0, 1, 1], [], []>} : vector<128x128xf32>, vector<128x128xf32>, vector<128x128xf32> -> vector<128x128xf32>
    %15 = arith.addf %8, %14 : vector<128x128xf32>
    %c2 = arith.constant 2 : index
    %c0_16 = arith.constant 0 : index
    %c0_17 = arith.constant 0 : index
    %16 = vector.load %arg2[%c2, %c0_16, %c0_17] : memref<3x128x128xf32, #tpu.memory_space<vmem>>, vector<1x128x128xf32>
    %17 = vector.shape_cast %16 : vector<1x128x128xf32> to vector<128x128xf32>
    %cst_18 = arith.constant dense<0.000000e+00> : vector<128x128xf32>
    %18 = tpu.matmul %0, %17, %cst_18 {dimension_numbers = #tpu.dot_dimension_numbers<[1], [0], [0], [1], [0, 0, 1, 1], [], []>} : vector<128x128xf32>, vector<128x128xf32>, vector<128x128xf32> -> vector<128x128xf32>
    %c2_19 = arith.constant 2 : index
    %c0_20 = arith.constant 0 : index
    %c0_21 = arith.constant 0 : index
    %19 = vector.load %arg0[%c2_19, %c0_20, %c0_21] : memref<3x128x128xf32, #tpu.memory_space<vmem>>, vector<1x128x128xf32>
    %20 = vector.shape_cast %19 : vector<1x128x128xf32> to vector<128x128xf32>
    %cst_22 = arith.constant dense<0.000000e+00> : vector<128x128xf32>
    %21 = tpu.matmul %20, %18, %cst_22 {dimension_numbers = #tpu.dot_dimension_numbers<[1], [0], [0], [1], [0, 0, 1, 1], [], []>} : vector<128x128xf32>, vector<128x128xf32>, vector<128x128xf32> -> vector<128x128xf32>
    %22 = arith.addf %15, %21 : vector<128x128xf32>
    %c0_23 = arith.constant 0 : index
    %c0_24 = arith.constant 0 : index
    %23 = vector.load %arg3[%c0_23, %c0_24] : memref<1x128xf32, #tpu.memory_space<vmem>>, vector<1x128xf32>
    %24 = vector.broadcast %23 : vector<1x128xf32> to vector<128x128xf32>
    %25 = arith.addf %22, %24 : vector<128x128xf32>
    %cst_25 = arith.constant 0.000000e+00 : f32
    %26 = vector.broadcast %cst_25 : f32 to vector<128x128xf32>
    %27 = arith.maximumf %25, %26 : vector<128x128xf32>
    %cst_26 = arith.constant 0.000000e+00 : f32
    %28 = vector.broadcast %cst_26 : f32 to vector<128x128xf32>
    %c0_27 = arith.constant 0 : index
    %c0_28 = arith.constant 0 : index
    %c0_29 = arith.constant 0 : index
    %29 = vector.load %arg4[%c0_27, %c0_28, %c0_29] : memref<3x128x128xf32, #tpu.memory_space<vmem>>, vector<1x128x128xf32>
    %30 = vector.shape_cast %29 : vector<1x128x128xf32> to vector<128x128xf32>
    %cst_30 = arith.constant dense<0.000000e+00> : vector<128x128xf32>
    %31 = tpu.matmul %27, %30, %cst_30 {dimension_numbers = #tpu.dot_dimension_numbers<[1], [0], [0], [1], [0, 0, 1, 1], [], []>} : vector<128x128xf32>, vector<128x128xf32>, vector<128x128xf32> -> vector<128x128xf32>
    %c0_31 = arith.constant 0 : index
    %c0_32 = arith.constant 0 : index
    %c0_33 = arith.constant 0 : index
    %32 = vector.load %arg0[%c0_31, %c0_32, %c0_33] : memref<3x128x128xf32, #tpu.memory_space<vmem>>, vector<1x128x128xf32>
    %33 = vector.shape_cast %32 : vector<1x128x128xf32> to vector<128x128xf32>
    %cst_34 = arith.constant dense<0.000000e+00> : vector<128x128xf32>
    %34 = tpu.matmul %33, %31, %cst_34 {dimension_numbers = #tpu.dot_dimension_numbers<[1], [0], [0], [1], [0, 0, 1, 1], [], []>} : vector<128x128xf32>, vector<128x128xf32>, vector<128x128xf32> -> vector<128x128xf32>
    %35 = arith.addf %28, %34 : vector<128x128xf32>
    %c1_35 = arith.constant 1 : index
    %c0_36 = arith.constant 0 : index
    %c0_37 = arith.constant 0 : index
    %36 = vector.load %arg4[%c1_35, %c0_36, %c0_37] : memref<3x128x128xf32, #tpu.memory_space<vmem>>, vector<1x128x128xf32>
    %37 = vector.shape_cast %36 : vector<1x128x128xf32> to vector<128x128xf32>
    %cst_38 = arith.constant dense<0.000000e+00> : vector<128x128xf32>
    %38 = tpu.matmul %27, %37, %cst_38 {dimension_numbers = #tpu.dot_dimension_numbers<[1], [0], [0], [1], [0, 0, 1, 1], [], []>} : vector<128x128xf32>, vector<128x128xf32>, vector<128x128xf32> -> vector<128x128xf32>
    %c1_39 = arith.constant 1 : index
    %c0_40 = arith.constant 0 : index
    %c0_41 = arith.constant 0 : index
    %39 = vector.load %arg0[%c1_39, %c0_40, %c0_41] : memref<3x128x128xf32, #tpu.memory_space<vmem>>, vector<1x128x128xf32>
    %40 = vector.shape_cast %39 : vector<1x128x128xf32> to vector<128x128xf32>
    %cst_42 = arith.constant dense<0.000000e+00> : vector<128x128xf32>
    %41 = tpu.matmul %40, %38, %cst_42 {dimension_numbers = #tpu.dot_dimension_numbers<[1], [0], [0], [1], [0, 0, 1, 1], [], []>} : vector<128x128xf32>, vector<128x128xf32>, vector<128x128xf32> -> vector<128x128xf32>
    %42 = arith.addf %35, %41 : vector<128x128xf32>
    %c2_43 = arith.constant 2 : index
    %c0_44 = arith.constant 0 : index
    %c0_45 = arith.constant 0 : index
    %43 = vector.load %arg4[%c2_43, %c0_44, %c0_45] : memref<3x128x128xf32, #tpu.memory_space<vmem>>, vector<1x128x128xf32>
    %44 = vector.shape_cast %43 : vector<1x128x128xf32> to vector<128x128xf32>
    %cst_46 = arith.constant dense<0.000000e+00> : vector<128x128xf32>
    %45 = tpu.matmul %27, %44, %cst_46 {dimension_numbers = #tpu.dot_dimension_numbers<[1], [0], [0], [1], [0, 0, 1, 1], [], []>} : vector<128x128xf32>, vector<128x128xf32>, vector<128x128xf32> -> vector<128x128xf32>
    %c2_47 = arith.constant 2 : index
    %c0_48 = arith.constant 0 : index
    %c0_49 = arith.constant 0 : index
    %46 = vector.load %arg0[%c2_47, %c0_48, %c0_49] : memref<3x128x128xf32, #tpu.memory_space<vmem>>, vector<1x128x128xf32>
    %47 = vector.shape_cast %46 : vector<1x128x128xf32> to vector<128x128xf32>
    %cst_50 = arith.constant dense<0.000000e+00> : vector<128x128xf32>
    %48 = tpu.matmul %47, %45, %cst_50 {dimension_numbers = #tpu.dot_dimension_numbers<[1], [0], [0], [1], [0, 0, 1, 1], [], []>} : vector<128x128xf32>, vector<128x128xf32>, vector<128x128xf32> -> vector<128x128xf32>
    %49 = arith.addf %42, %48 : vector<128x128xf32>
    %c0_51 = arith.constant 0 : index
    %c0_52 = arith.constant 0 : index
    %50 = vector.load %arg5[%c0_51, %c0_52] : memref<1x128xf32, #tpu.memory_space<vmem>>, vector<1x128xf32>
    %51 = vector.broadcast %50 : vector<1x128xf32> to vector<128x128xf32>
    %52 = arith.addf %49, %51 : vector<128x128xf32>
    %c0_53 = arith.constant 0 : index
    %c0_54 = arith.constant 0 : index
    %53 = vector.load %arg6[%c0_53, %c0_54] : memref<128x128xf32, #tpu.memory_space<vmem>>, vector<128x128xf32>
    tpu.vector_store %arg6[%c0_53, %c0_54], %52 {strides = array<i32>} : memref<128x128xf32, #tpu.memory_space<vmem>>, vector<128x128xf32>,
    return
  }
}

</mosaic_0001>

<llo_original>
// kernel: hetero_gnn_forward.1
$region0: #{hetero_gnn_forward.1}
  #allocation0 [shape = 'u32[]', space=smem, size = 0x4, offset = 0x4, fixed_abs, tag = 'smem constant byte address 0x4 - core index']
  #allocation1 [shape = 'u32[144,128]{1,0:T(1,128)}', space=vmem, size = 0x12000, scoped, tag = 'internal scratch']
  %s0 = inlined_call_operand.vmem [shape: f32[3,128,128], index: 0, kind: input, shape index: {}]
  %s1 = inlined_call_operand.vmem [shape: f32[128,128], index: 1, kind: input, shape index: {}]
  %s2 = inlined_call_operand.vmem [shape: f32[3,128,128], index: 2, kind: input, shape index: {}]
  %s3 = inlined_call_operand.vmem [shape: f32[1,128], index: 3, kind: input, shape index: {}]
  %s4 = inlined_call_operand.vmem [shape: f32[3,128,128], index: 4, kind: input, shape index: {}]
  %s5 = inlined_call_operand.vmem [shape: f32[1,128], index: 5, kind: input, shape index: {}]
  %s6 = inlined_call_operand.vmem [shape: f32[128,128], index: 6, kind: output, shape index: {}]
  %s7 = sld [smem:[#allocation0]]
  $region34: #{hetero_gnn_forward.1} parent=0
    _
  %s9 = ssub.s32 1, %s7
  %s10 = scalar_select 0, %s9, %s7
  // Predicated region
  $region2: #{hetero_gnn_forward.1} parent=0 // pred_check
    _
  $region3: #{hetero_gnn_forward.1} parent=0 // pred_check_branch
    %12 = sbr.rel (0) target = $region5
  $region4: #{hetero_gnn_forward.1} parent=0 // pred_region
    _
  $region5: #{hetero_gnn_forward.1} parent=0 // pred_fallthru
    _
  // Predicated region
  $region6: #{hetero_gnn_forward.1} parent=0 // pred_check
    _
  $region7: #{hetero_gnn_forward.1} parent=0 // pred_check_branch
    %14 = sbr.rel (0) target = $region9
  $region8: #{hetero_gnn_forward.1} parent=0 // pred_region
    _
  $region9: #{hetero_gnn_forward.1} parent=0 // pred_fallthru
    _
  // Predicated region
  $region10: #{hetero_gnn_forward.1} parent=0 // pred_check
    _
  $region11: #{hetero_gnn_forward.1} parent=0 // pred_check_branch
    %16 = sbr.rel (0) target = $region13
  $region12: #{hetero_gnn_forward.1} parent=0 // pred_region
    _
  $region13: #{hetero_gnn_forward.1} parent=0 // pred_fallthru
    _
  // Predicated region
  $region14: #{hetero_gnn_forward.1} parent=0 // pred_check
    _
  $region15: #{hetero_gnn_forward.1} parent=0 // pred_check_branch
    %18 = sbr.rel (0) target = $region17
  $region16: #{hetero_gnn_forward.1} parent=0 // pred_region
    _
  $region17: #{hetero_gnn_forward.1} parent=0 // pred_fallthru
    _
  // Predicated region
  $region18: #{hetero_gnn_forward.1} parent=0 // pred_check
    _
  $region19: #{hetero_gnn_forward.1} parent=0 // pred_check_branch
    %20 = sbr.rel (0) target = $region21
  $region20: #{hetero_gnn_forward.1} parent=0 // pred_region
    _
  $region21: #{hetero_gnn_forward.1} parent=0 // pred_fallthru
    _
  // Predicated region
  $region22: #{hetero_gnn_forward.1} parent=0 // pred_check
    _
  $region23: #{hetero_gnn_forward.1} parent=0 // pred_check_branch
    %22 = sbr.rel (0) target = $region25
  $region24: #{hetero_gnn_forward.1} parent=0 // pred_region
    _
  $region25: #{hetero_gnn_forward.1} parent=0 // pred_fallthru
    _
  %v23 = vld [vmem:[%s1] sm:$0xff]
  %v24 = vld [vmem:[%s1 + $0x8] sm:$0xff]
  %v25 = vld [vmem:[%s1 + $0x10] sm:$0xff]
  %v26 = vld [vmem:[%s1 + $0x18] sm:$0xff]
  %v27 = vld [vmem:[%s1 + $0x20] sm:$0xff]
  %v28 = vld [vmem:[%s1 + $0x28] sm:$0xff]
  %v29 = vld [vmem:[%s1 + $0x30] sm:$0xff]
  %v30 = vld [vmem:[%s1 + $0x38] sm:$0xff]
  %v31 = vld [vmem:[%s1 + $0x40] sm:$0xff]
  %v32 = vld [vmem:[%s1 + $0x48] sm:$0xff]
  %v33 = vld [vmem:[%s1 + $0x50] sm:$0xff]
  %v34 = vld [vmem:[%s1 + $0x58] sm:$0xff]
  %v35 = vld [vmem:[%s1 + $0x60] sm:$0xff]
  %v36 = vld [vmem:[%s1 + $0x68] sm:$0xff]
  %v37 = vld [vmem:[%s1 + $0x70] sm:$0xff]
  %v38 = vld [vmem:[%s1 + $0x78] sm:$0xff]
  %v39 = vld [vmem:[%s2] sm:$0xff]
  %v40 = vld [vmem:[%s2 + $0x8] sm:$0xff]
  %v41 = vld [vmem:[%s2 + $0x10] sm:$0xff]
  %v42 = vld [vmem:[%s2 + $0x18] sm:$0xff]
  %v43 = vld [vmem:[%s2 + $0x20] sm:$0xff]
  %v44 = vld [vmem:[%s2 + $0x28] sm:$0xff]
  %v45 = vld [vmem:[%s2 + $0x30] sm:$0xff]
  %v46 = vld [vmem:[%s2 + $0x38] sm:$0xff]
  %v47 = vld [vmem:[%s2 + $0x40] sm:$0xff]
  %v48 = vld [vmem:[%s2 + $0x48] sm:$0xff]
  %v49 = vld [vmem:[%s2 + $0x50] sm:$0xff]
  %v50 = vld [vmem:[%s2 + $0x58] sm:$0xff]
  %v51 = vld [vmem:[%s2 + $0x60] sm:$0xff]
  %v52 = vld [vmem:[%s2 + $0x68] sm:$0xff]
  %v53 = vld [vmem:[%s2 + $0x70] sm:$0xff]
  %v54 = vld [vmem:[%s2 + $0x78] sm:$0xff]
  %55 = vmatprep.subr.mxu0 0.0
  %56 = vmatpush1.msra.mxu0 %v54
  %57 = vmatprep.subr.mxu0 0.0
  %58 = vmatpush1.msra.mxu0 %v53
  %59 = vmatprep.subr.mxu0 0.0
  %60 = vmatpush1.msra.mxu0 %v52
  %61 = vmatprep.subr.mxu0 0.0
  %62 = vmatpush1.msra.mxu0 %v51
  %63 = vmatprep.subr.mxu0 0.0
  %64 = vmatpush1.msra.mxu0 %v50
  %65 = vmatprep.subr.mxu0 0.0
  %66 = vmatpush1.msra.mxu0 %v49
  %67 = vmatprep.subr.mxu0 0.0
  %68 = vmatpush1.msra.mxu0 %v48
  %69 = vmatprep.subr.mxu0 0.0
  %70 = vmatpush1.msra.mxu0 %v47
  %71 = vmatprep.subr.mxu0 0.0
  %72 = vmatpush1.msra.mxu0 %v46
  %73 = vmatprep.subr.mxu0 0.0
  %74 = vmatpush1.msra.mxu0 %v45
  %75 = vmatprep.subr.mxu0 0.0
  %76 = vmatpush1.msra.mxu0 %v44
  %77 = vmatprep.subr.mxu0 0.0
  %78 = vmatpush1.msra.mxu0 %v43
  %79 = vmatprep.subr.mxu0 0.0
  %80 = vmatpush1.msra.mxu0 %v42
  %81 = vmatprep.subr.mxu0 0.0
  %82 = vmatpush1.msra.mxu0 %v41
  %83 = vmatprep.subr.mxu0 0.0
  %84 = vmatpush1.msra.mxu0 %v40
  %85 = vmatprep.subr.mxu0 0.0
  %86 = vmatpush1.msra.mxu0 %v39
  %87 = vmatprep.subr.mxu0 0.0
  %88 = vmatpush2.msra.mxu0 0.0
  %89 = vmatprep.subr.mxu0 0.0
  %90 = vmatpush2.msra.mxu0 0.0
  %91 = vmatprep.subr.mxu0 0.0
  %92 = vmatpush2.msra.mxu0 0.0
  %93 = vmatprep.subr.mxu0 0.0
  %94 = vmatpush2.msra.mxu0 0.0
  %95 = vmatprep.subr.mxu0 0.0
  %96 = vmatpush2.msra.mxu0 0.0
  %97 = vmatprep.subr.mxu0 0.0
  %98 = vmatpush2.msra.mxu0 0.0
  %99 = vmatprep.subr.mxu0 0.0
  %100 = vmatpush2.msra.mxu0 0.0
  %101 = vmatprep.subr.mxu0 0.0
  %102 = vmatpush2.msra.mxu0 0.0
  %103 = vmatprep.subr.mxu0 0.0
  %104 = vmatpush2.msra.mxu0 0.0
  %105 = vmatprep.subr.mxu0 0.0
  %106 = vmatpush2.msra.mxu0 0.0
  %107 = vmatprep.subr.mxu0 0.0
  %108 = vmatpush2.msra.mxu0 0.0
  %109 = vmatprep.subr.mxu0 0.0
  %110 = vmatpush2.msra.mxu0 0.0
  %111 = vmatprep.subr.mxu0 0.0
  %112 = vmatpush2.msra.mxu0 0.0
  %113 = vmatprep.subr.mxu0 0.0
  %114 = vmatpush2.msra.mxu0 0.0
  %115 = vmatprep.subr.mxu0 0.0
  %116 = vmatpush2.msra.mxu0 0.0
  %117 = vmatprep.subr.mxu0 0.0
  %118 = vmatpush2.msra.mxu0 0.0
  %119 = vmatprep.mubr.f32.mxu0 0.0
  %120 = vmatmul.mubr.f32.gmra.mxu0 %v23
  %v121 = vpop.f32.mrf.mxu0
  %v122 = vadd.f32 0.0, %v121
  %v123 = vpop.f32.mrf.mxu0
  %124 = vmatprep.mubr.f32.mxu0 0.0
  %125 = vmatmul.mubr.f32.gmra.mxu0 %v24
  %v126 = vpop.f32.mrf.mxu0
  %v127 = vadd.f32 0.0, %v126
  %v128 = vpop.f32.mrf.mxu0
  %129 = vmatprep.mubr.f32.mxu0 0.0
  %130 = vmatmul.mubr.f32.gmra.mxu0 %v25
  %v131 = vpop.f32.mrf.mxu0
  %v132 = vadd.f32 0.0, %v131
  %v133 = vpop.f32.mrf.mxu0
  %134 = vmatprep.mubr.f32.mxu0 0.0
  %135 = vmatmul.mubr.f32.gmra.mxu0 %v26
  %v136 = vpop.f32.mrf.mxu0
  %v137 = vadd.f32 0.0, %v136
  %v138 = vpop.f32.mrf.mxu0
  %139 = vmatprep.mubr.f32.mxu0 0.0
  %140 = vmatmul.mubr.f32.gmra.mxu0 %v27
  %v141 = vpop.f32.mrf.mxu0
  %v142 = vadd.f32 0.0, %v141
  %v143 = vpop.f32.mrf.mxu0
  %144 = vmatprep.mubr.f32.mxu0 0.0
  %145 = vmatmul.mubr.f32.gmra.mxu0 %v28
  %v146 = vpop.f32.mrf.mxu0
  %v147 = vadd.f32 0.0, %v146
  %v148 = vpop.f32.mrf.mxu0
  %149 = vmatprep.mubr.f32.mxu0 0.0
  %150 = vmatmul.mubr.f32.gmra.mxu0 %v29
  %v151 = vpop.f32.mrf.mxu0
  %v152 = vadd.f32 0.0, %v151
  %v153 = vpop.f32.mrf.mxu0
  %154 = vmatprep.mubr.f32.mxu0 0.0
  %155 = vmatmul.mubr.f32.gmra.mxu0 %v30
  %v156 = vpop.f32.mrf.mxu0
  %v157 = vadd.f32 0.0, %v156
  %v158 = vpop.f32.mrf.mxu0
  %159 = vmatprep.mubr.f32.mxu0 0.0
  %160 = vmatmul.mubr.f32.gmra.mxu0 %v31
  %v161 = vpop.f32.mrf.mxu0
  %v162 = vadd.f32 0.0, %v161
  %v163 = vpop.f32.mrf.mxu0
  %164 = vmatprep.mubr.f32.mxu0 0.0
  %165 = vmatmul.mubr.f32.gmra.mxu0 %v32
  %v166 = vpop.f32.mrf.mxu0
  %v167 = vadd.f32 0.0, %v166
  %v168 = vpop.f32.mrf.mxu0
  %169 = vmatprep.mubr.f32.mxu0 0.0
  %170 = vmatmul.mubr.f32.gmra.mxu0 %v33
  %v171 = vpop.f32.mrf.mxu0
  %v172 = vadd.f32 0.0, %v171
  %v173 = vpop.f32.mrf.mxu0
  %174 = vmatprep.mubr.f32.mxu0 0.0
  %175 = vmatmul.mubr.f32.gmra.mxu0 %v34
  %v176 = vpop.f32.mrf.mxu0
  %v177 = vadd.f32 0.0, %v176
  %v178 = vpop.f32.mrf.mxu0
  %179 = vmatprep.mubr.f32.mxu0 0.0
  %180 = vmatmul.mubr.f32.gmra.mxu0 %v35
  %v181 = vpop.f32.mrf.mxu0
  %v182 = vadd.f32 0.0, %v181
  %v183 = vpop.f32.mrf.mxu0
  %184 = vmatprep.mubr.f32.mxu0 0.0
  %185 = vmatmul.mubr.f32.gmra.mxu0 %v36
  %v186 = vpop.f32.mrf.mxu0
  %v187 = vadd.f32 0.0, %v186
  %v188 = vpop.f32.mrf.mxu0
  %189 = vmatprep.mubr.f32.mxu0 0.0
  %190 = vmatmul.mubr.f32.gmra.mxu0 %v37
  %v191 = vpop.f32.mrf.mxu0
  %v192 = vadd.f32 0.0, %v191
  %v193 = vpop.f32.mrf.mxu0
  %194 = vmatprep.mubr.f32.mxu0 0.0
  %195 = vmatmul.mubr.f32.gmra.mxu0 %v38
  %v196 = vpop.f32.mrf.mxu0
  %v197 = vadd.f32 0.0, %v196
  %v198 = vpop.f32.mrf.mxu0
  %199 = vdwg.mxu0
  %v200 = vld [vmem:[%s0] sm:$0xff]
  %v201 = vld [vmem:[%s0 + $0x8] sm:$0xff]
  %v202 = vld [vmem:[%s0 + $0x10] sm:$0xff]
  %v203 = vld [vmem:[%s0 + $0x18] sm:$0xff]
  %v204 = vld [vmem:[%s0 + $0x20] sm:$0xff]
  %v205 = vld [vmem:[%s0 + $0x28] sm:$0xff]
  %v206 = vld [vmem:[%s0 + $0x30] sm:$0xff]
  %v207 = vld [vmem:[%s0 + $0x38] sm:$0xff]
  %v208 = vld [vmem:[%s0 + $0x40] sm:$0xff]
  %v209 = vld [vmem:[%s0 + $0x48] sm:$0xff]
  %v210 = vld [vmem:[%s0 + $0x50] sm:$0xff]
  %v211 = vld [vmem:[%s0 + $0x58] sm:$0xff]
  %v212 = vld [vmem:[%s0 + $0x60] sm:$0xff]
  %v213 = vld [vmem:[%s0 + $0x68] sm:$0xff]
  %v214 = vld [vmem:[%s0 + $0x70] sm:$0xff]
  %v215 = vld [vmem:[%s0 + $0x78] sm:$0xff]
  %s216 = scalar_lea.vmem %s2, 128
  %v217 = vld [vmem:[%s216] sm:$0xff]
  %v218 = vld [vmem:[%s216 + $0x8] sm:$0xff]
  %v219 = vld [vmem:[%s216 + $0x10] sm:$0xff]
  %v220 = vld [vmem:[%s216 + $0x18] sm:$0xff]
  %v221 = vld [vmem:[%s216 + $0x20] sm:$0xff]
  %v222 = vld [vmem:[%s216 + $0x28] sm:$0xff]
  %v223 = vld [vmem:[%s216 + $0x30] sm:$0xff]
  %v224 = vld [vmem:[%s216 + $0x38] sm:$0xff]
  %v225 = vld [vmem:[%s216 + $0x40] sm:$0xff]
  %v226 = vld [vmem:[%s216 + $0x48] sm:$0xff]
  %v227 = vld [vmem:[%s216 + $0x50] sm:$0xff]
  %v228 = vld [vmem:[%s216 + $0x58] sm:$0xff]
  %v229 = vld [vmem:[%s216 + $0x60] sm:$0xff]
  %v230 = vld [vmem:[%s216 + $0x68] sm:$0xff]
  %v231 = vld [vmem:[%s216 + $0x70] sm:$0xff]
  %v232 = vld [vmem:[%s216 + $0x78] sm:$0xff]
  %233 = vmatprep.subr.mxu0 0.0
  %234 = vmatpush1.msra.mxu0 %v232
  %235 = vmatprep.subr.mxu0 0.0
  %236 = vmatpush1.msra.mxu0 %v231
  %237 = vmatprep.subr.mxu0 0.0
  %238 = vmatpush1.msra.mxu0 %v230
  %239 = vmatprep.subr.mxu0 0.0
  %240 = vmatpush1.msra.mxu0 %v229
  %241 = vmatprep.subr.mxu0 0.0
  %242 = vmatpush1.msra.mxu0 %v228
  %243 = vmatprep.subr.mxu0 0.0
  %244 = vmatpush1.msra.mxu0 %v227
  %245 = vmatprep.subr.mxu0 0.0
  %246 = vmatpush1.msra.mxu0 %v226
  %247 = vmatprep.subr.mxu0 0.0
  %248 = vmatpush1.msra.mxu0 %v225
  %249 = vmatprep.subr.mxu0 0.0
  %250 = vmatpush1.msra.mxu0 %v224
  %251 = vmatprep.subr.mxu0 0.0
  %252 = vmatpush1.msra.mxu0 %v223
  %253 = vmatprep.subr.mxu0 0.0
  %254 = vmatpush1.msra.mxu0 %v222
  %255 = vmatprep.subr.mxu0 0.0
  %256 = vmatpush1.msra.mxu0 %v221
  %257 = vmatprep.subr.mxu0 0.0
  %258 = vmatpush1.msra.mxu0 %v220
  %259 = vmatprep.subr.mxu0 0.0
  %260 = vmatpush1.msra.mxu0 %v219
  %261 = vmatprep.subr.mxu0 0.0
  %262 = vmatpush1.msra.mxu0 %v218
  %263 = vmatprep.subr.mxu0 0.0
  %264 = vmatpush1.msra.mxu0 %v217
  %265 = vmatprep.subr.mxu0 0.0
  %266 = vmatpush2.msra.mxu0 0.0
  %267 = vmatprep.subr.mxu0 0.0
  %268 = vmatpush2.msra.mxu0 0.0
  %269 = vmatprep.subr.mxu0 0.0
  %270 = vmatpush2.msra.mxu0 0.0
  %271 = vmatprep.subr.mxu0 0.0
  %272 = vmatpush2.msra.mxu0 0.0
  %273 = vmatprep.subr.mxu0 0.0
  %274 = vmatpush2.msra.mxu0 0.0
  %275 = vmatprep.subr.mxu0 0.0
  %276 = vmatpush2.msra.mxu0 0.0
  %277 = vmatprep.subr.mxu0 0.0
  %278 = vmatpush2.msra.mxu0 0.0
  %279 = vmatprep.subr.mxu0 0.0
  %280 = vmatpush2.msra.mxu0 0.0
  %281 = vmatprep.subr.mxu0 0.0
  %282 = vmatpush2.msra.mxu0 0.0
  %283 = vmatprep.subr.mxu0 0.0
  %284 = vmatpush2.msra.mxu0 0.0
  %285 = vmatprep.subr.mxu0 0.0
  %286 = vmatpush2.msra.mxu0 0.0
  %287 = vmatprep.subr.mxu0 0.0
  %288 = vmatpush2.msra.mxu0 0.0
  %289 = vmatprep.subr.mxu0 0.0
  %290 = vmatpush2.msra.mxu0 0.0
  %291 = vmatprep.subr.mxu0 0.0
  %292 = vmatpush2.msra.mxu0 0.0
  %293 = vmatprep.subr.mxu0 0.0
  %294 = vmatpush2.msra.mxu0 0.0
  %295 = vmatprep.subr.mxu0 0.0
  %296 = vmatpush2.msra.mxu0 0.0
  %297 = vmatprep.mubr.f32.mxu0 0.0
  %298 = vmatmul.mubr.f32.gmra.mxu0 %v23
  %v299 = vpop.f32.mrf.mxu0
  %v300 = vadd.f32 0.0, %v299
  %v301 = vpop.f32.mrf.mxu0
  %302 = vmatprep.mubr.f32.mxu0 0.0
  %303 = vmatmul.mubr.f32.gmra.mxu0 %v24
  %v304 = vpop.f32.mrf.mxu0
  %v305 = vadd.f32 0.0, %v304
  %v306 = vpop.f32.mrf.mxu0
  %307 = vmatprep.mubr.f32.mxu0 0.0
  %308 = vmatmul.mubr.f32.gmra.mxu0 %v25
  %v309 = vpop.f32.mrf.mxu0
  %v310 = vadd.f32 0.0, %v309
  %v311 = vpop.f32.mrf.mxu0
  %312 = vmatprep.mubr.f32.mxu0 0.0
  %313 = vmatmul.mubr.f32.gmra.mxu0 %v26
  %v314 = vpop.f32.mrf.mxu0
  %v315 = vadd.f32 0.0, %v314
  %v316 = vpop.f32.mrf.mxu0
  %317 = vmatprep.mubr.f32.mxu0 0.0
  %318 = vmatmul.mubr.f32.gmra.mxu0 %v27
  %v319 = vpop.f32.mrf.mxu0
  %v320 = vadd.f32 0.0, %v319
  %v321 = vpop.f32.mrf.mxu0
  %322 = vmatprep.mubr.f32.mxu0 0.0
  %323 = vmatmul.mubr.f32.gmra.mxu0 %v28
  %v324 = vpop.f32.mrf.mxu0
  %v325 = vadd.f32 0.0, %v324
  %v326 = vpop.f32.mrf.mxu0
  %327 = vmatprep.mubr.f32.mxu0 0.0
  %328 = vmatmul.mubr.f32.gmra.mxu0 %v29
  %v329 = vpop.f32.mrf.mxu0
  %v330 = vadd.f32 0.0, %v329
  %v331 = vpop.f32.mrf.mxu0
  %332 = vmatprep.mubr.f32.mxu0 0.0
  %333 = vmatmul.mubr.f32.gmra.mxu0 %v30
  %v334 = vpop.f32.mrf.mxu0
  %v335 = vadd.f32 0.0, %v334
  %v336 = vpop.f32.mrf.mxu0
  %337 = vmatprep.mubr.f32.mxu0 0.0
  %338 = vmatmul.mubr.f32.gmra.mxu0 %v31
  %v339 = vpop.f32.mrf.mxu0
  %v340 = vadd.f32 0.0, %v339
  %v341 = vpop.f32.mrf.mxu0
  %342 = vmatprep.mubr.f32.mxu0 0.0
  %343 = vmatmul.mubr.f32.gmra.mxu0 %v32
  %v344 = vpop.f32.mrf.mxu0
  %v345 = vadd.f32 0.0, %v344
  %v346 = vpop.f32.mrf.mxu0
  %347 = vmatprep.mubr.f32.mxu0 0.0
  %348 = vmatmul.mubr.f32.gmra.mxu0 %v33
  %v349 = vpop.f32.mrf.mxu0
  %v350 = vadd.f32 0.0, %v349
  %v351 = vpop.f32.mrf.mxu0
  %352 = vmatprep.mubr.f32.mxu0 0.0
  %353 = vmatmul.mubr.f32.gmra.mxu0 %v34
  %v354 = vpop.f32.mrf.mxu0
  %v355 = vadd.f32 0.0, %v354
  %v356 = vpop.f32.mrf.mxu0
  %357 = vmatprep.mubr.f32.mxu0 0.0
  %358 = vmatmul.mubr.f32.gmra.mxu0 %v35
  %v359 = vpop.f32.mrf.mxu0
  %v360 = vadd.f32 0.0, %v359
  %v361 = vpop.f32.mrf.mxu0
  %362 = vmatprep.mubr.f32.mxu0 0.0
  %363 = vmatmul.mubr.f32.gmra.mxu0 %v36
  %v364 = vpop.f32.mrf.mxu0
  %v365 = vadd.f32 0.0, %v364
  %v366 = vpop.f32.mrf.mxu0
  %367 = vmatprep.mubr.f32.mxu0 0.0
  %368 = vmatmul.mubr.f32.gmra.mxu0 %v37
  %v369 = vpop.f32.mrf.mxu0
  %v370 = vadd.f32 0.0, %v369
  %v371 = vpop.f32.mrf.mxu0
  %372 = vmatprep.mubr.f32.mxu0 0.0
  %373 = vmatmul.mubr.f32.gmra.mxu0 %v38
  %v374 = vpop.f32.mrf.mxu0
  %v375 = vadd.f32 0.0, %v374
  %v376 = vpop.f32.mrf.mxu0
  %377 = vdwg.mxu0
  %s378 = scalar_lea.vmem %s0, 128
  %v379 = vld [vmem:[%s378] sm:$0xff]
  %v380 = vld [vmem:[%s378 + $0x8] sm:$0xff]
  %v381 = vld [vmem:[%s378 + $0x10] sm:$0xff]
  %v382 = vld [vmem:[%s378 + $0x18] sm:$0xff]
  %v383 = vld [vmem:[%s378 + $0x20] sm:$0xff]
  %v384 = vld [vmem:[%s378 + $0x28] sm:$0xff]
  %v385 = vld [vmem:[%s378 + $0x30] sm:$0xff]
  %v386 = vld [vmem:[%s378 + $0x38] sm:$0xff]
  %v387 = vld [vmem:[%s378 + $0x40] sm:$0xff]
  %v388 = vld [vmem:[%s378 + $0x48] sm:$0xff]
  %v389 = vld [vmem:[%s378 + $0x50] sm:$0xff]
  %v390 = vld [vmem:[%s378 + $0x58] sm:$0xff]
  %v391 = vld [vmem:[%s378 + $0x60] sm:$0xff]
  %v392 = vld [vmem:[%s378 + $0x68] sm:$0xff]
  %v393 = vld [vmem:[%s378 + $0x70] sm:$0xff]
  %v394 = vld [vmem:[%s378 + $0x78] sm:$0xff]
  %395 = vmatprep.subr.mxu0 0.0
  %396 = vmatpush1.msra.mxu0 %v375
  %397 = vmatprep.subr.mxu0 0.0
  %398 = vmatpush1.msra.mxu0 %v370
  %399 = vmatprep.subr.mxu0 0.0
  %400 = vmatpush1.msra.mxu0 %v365
  %401 = vmatprep.subr.mxu0 0.0
  %402 = vmatpush1.msra.mxu0 %v360
  %403 = vmatprep.subr.mxu0 0.0
  %404 = vmatpush1.msra.mxu0 %v355
  %405 = vmatprep.subr.mxu0 0.0
  %406 = vmatpush1.msra.mxu0 %v350
  %407 = vmatprep.subr.mxu0 0.0
  %408 = vmatpush1.msra.mxu0 %v345
  %409 = vmatprep.subr.mxu0 0.0
  %410 = vmatpush1.msra.mxu0 %v340
  %411 = vmatprep.subr.mxu0 0.0
  %412 = vmatpush1.msra.mxu0 %v335
  %413 = vmatprep.subr.mxu0 0.0
  %414 = vmatpush1.msra.mxu0 %v330
  %415 = vmatprep.subr.mxu0 0.0
  %416 = vmatpush1.msra.mxu0 %v325
  %417 = vmatprep.subr.mxu0 0.0
  %418 = vmatpush1.msra.mxu0 %v320
  %419 = vmatprep.subr.mxu0 0.0
  %420 = vmatpush1.msra.mxu0 %v315
  %421 = vmatprep.subr.mxu0 0.0
  %422 = vmatpush1.msra.mxu0 %v310
  %423 = vmatprep.subr.mxu0 0.0
  %424 = vmatpush1.msra.mxu0 %v305
  %425 = vmatprep.subr.mxu0 0.0
  %426 = vmatpush1.msra.mxu0 %v300
  %427 = vmatprep.subr.mxu0 0.0
  %428 = vmatpush2.msra.mxu0 0.0
  %429 = vmatprep.subr.mxu0 0.0
  %430 = vmatpush2.msra.mxu0 0.0
  %431 = vmatprep.subr.mxu0 0.0
  %432 = vmatpush2.msra.mxu0 0.0
  %433 = vmatprep.subr.mxu0 0.0
  %434 = vmatpush2.msra.mxu0 0.0
  %435 = vmatprep.subr.mxu0 0.0
  %436 = vmatpush2.msra.mxu0 0.0
  %437 = vmatprep.subr.mxu0 0.0
  %438 = vmatpush2.msra.mxu0 0.0
  %439 = vmatprep.subr.mxu0 0.0
  %440 = vmatpush2.msra.mxu0 0.0
  %441 = vmatprep.subr.mxu0 0.0
  %442 = vmatpush2.msra.mxu0 0.0
  %443 = vmatprep.subr.mxu0 0.0
  %444 = vmatpush2.msra.mxu0 0.0
  %445 = vmatprep.subr.mxu0 0.0
  %446 = vmatpush2.msra.mxu0 0.0
  %447 = vmatprep.subr.mxu0 0.0
  %448 = vmatpush2.msra.mxu0 0.0
  %449 = vmatprep.subr.mxu0 0.0
  %450 = vmatpush2.msra.mxu0 0.0
  %451 = vmatprep.subr.mxu0 0.0
  %452 = vmatpush2.msra.mxu0 0.0
  %453 = vmatprep.subr.mxu0 0.0
  %454 = vmatpush2.msra.mxu0 0.0
  %455 = vmatprep.subr.mxu0 0.0
  %456 = vmatpush2.msra.mxu0 0.0
  %457 = vmatprep.subr.mxu0 0.0
  %458 = vmatpush2.msra.mxu0 0.0
  %459 = vmatprep.mubr.f32.mxu0 0.0
  %460 = vmatmul.mubr.f32.gmra.mxu0 %v379
  %v461 = vpop.f32.mrf.mxu0
  %v462 = vadd.f32 0.0, %v461
  %v463 = vpop.f32.mrf.mxu0
  %464 = vmatprep.mubr.f32.mxu0 0.0
  %465 = vmatmul.mubr.f32.gmra.mxu0 %v380
  %v466 = vpop.f32.mrf.mxu0
  %v467 = vadd.f32 0.0, %v466
  %v468 = vpop.f32.mrf.mxu0
  %469 = vmatprep.mubr.f32.mxu0 0.0
  %470 = vmatmul.mubr.f32.gmra.mxu0 %v381
  %v471 = vpop.f32.mrf.mxu0
  %v472 = vadd.f32 0.0, %v471
  %v473 = vpop.f32.mrf.mxu0
  %474 = vmatprep.mubr.f32.mxu0 0.0
  %475 = vmatmul.mubr.f32.gmra.mxu0 %v382
  %v476 = vpop.f32.mrf.mxu0
  %v477 = vadd.f32 0.0, %v476
  %v478 = vpop.f32.mrf.mxu0
  %479 = vmatprep.mubr.f32.mxu0 0.0
  %480 = vmatmul.mubr.f32.gmra.mxu0 %v383
  %v481 = vpop.f32.mrf.mxu0
  %v482 = vadd.f32 0.0, %v481
  %v483 = vpop.f32.mrf.mxu0
  %484 = vmatprep.mubr.f32.mxu0 0.0
  %485 = vmatmul.mubr.f32.gmra.mxu0 %v384
  %v486 = vpop.f32.mrf.mxu0
  %v487 = vadd.f32 0.0, %v486
  %v488 = vpop.f32.mrf.mxu0
  %489 = vmatprep.mubr.f32.mxu0 0.0
  %490 = vmatmul.mubr.f32.gmra.mxu0 %v385
  %v491 = vpop.f32.mrf.mxu0
  %v492 = vadd.f32 0.0, %v491
  %v493 = vpop.f32.mrf.mxu0
  %494 = vmatprep.mubr.f32.mxu0 0.0
  %495 = vmatmul.mubr.f32.gmra.mxu0 %v386
  %v496 = vpop.f32.mrf.mxu0
  %v497 = vadd.f32 0.0, %v496
  %v498 = vpop.f32.mrf.mxu0
  %499 = vmatprep.mubr.f32.mxu0 0.0
  %500 = vmatmul.mubr.f32.gmra.mxu0 %v387
  %v501 = vpop.f32.mrf.mxu0
  %v502 = vadd.f32 0.0, %v501
  %v503 = vpop.f32.mrf.mxu0
  %504 = vmatprep.mubr.f32.mxu0 0.0
  %505 = vmatmul.mubr.f32.gmra.mxu0 %v388
  %v506 = vpop.f32.mrf.mxu0
  %v507 = vadd.f32 0.0, %v506
  %v508 = vpop.f32.mrf.mxu0
  %509 = vmatprep.mubr.f32.mxu0 0.0
  %510 = vmatmul.mubr.f32.gmra.mxu0 %v389
  %v511 = vpop.f32.mrf.mxu0
  %v512 = vadd.f32 0.0, %v511
  %v513 = vpop.f32.mrf.mxu0
  %514 = vmatprep.mubr.f32.mxu0 0.0
  %515 = vmatmul.mubr.f32.gmra.mxu0 %v390
  %v516 = vpop.f32.mrf.mxu0
  %v517 = vadd.f32 0.0, %v516
  %v518 = vpop.f32.mrf.mxu0
  %519 = vmatprep.mubr.f32.mxu0 0.0
  %520 = vmatmul.mubr.f32.gmra.mxu0 %v391
  %v521 = vpop.f32.mrf.mxu0
  %v522 = vadd.f32 0.0, %v521
  %v523 = vpop.f32.mrf.mxu0
  %524 = vmatprep.mubr.f32.mxu0 0.0
  %525 = vmatmul.mubr.f32.gmra.mxu0 %v392
  %v526 = vpop.f32.mrf.mxu0
  %v527 = vadd.f32 0.0, %v526
  %v528 = vpop.f32.mrf.mxu0
  %529 = vmatprep.mubr.f32.mxu0 0.0
  %530 = vmatmul.mubr.f32.gmra.mxu0 %v393
  %v531 = vpop.f32.mrf.mxu0
  %v532 = vadd.f32 0.0, %v531
  %v533 = vpop.f32.mrf.mxu0
  %534 = vmatprep.mubr.f32.mxu0 0.0
  %535 = vmatmul.mubr.f32.gmra.mxu0 %v394
  %v536 = vpop.f32.mrf.mxu0
  %v537 = vadd.f32 0.0, %v536
  %v538 = vpop.f32.mrf.mxu0
  %539 = vdwg.mxu0
  %540 = vmatprep.subr.mxu0 0.0
  %541 = vmatpush1.msra.mxu0 %v197
  %542 = vmatprep.subr.mxu0 0.0
  %543 = vmatpush1.msra.mxu0 %v192
  %544 = vmatprep.subr.mxu0 0.0
  %545 = vmatpush1.msra.mxu0 %v187
  %546 = vmatprep.subr.mxu0 0.0
  %547 = vmatpush1.msra.mxu0 %v182
  %548 = vmatprep.subr.mxu0 0.0
  %549 = vmatpush1.msra.mxu0 %v177
  %550 = vmatprep.subr.mxu0 0.0
  %551 = vmatpush1.msra.mxu0 %v172
  %552 = vmatprep.subr.mxu0 0.0
  %553 = vmatpush1.msra.mxu0 %v167
  %554 = vmatprep.subr.mxu0 0.0
  %555 = vmatpush1.msra.mxu0 %v162
  %556 = vmatprep.subr.mxu0 0.0
  %557 = vmatpush1.msra.mxu0 %v157
  %558 = vmatprep.subr.mxu0 0.0
  %559 = vmatpush1.msra.mxu0 %v152
  %560 = vmatprep.subr.mxu0 0.0
  %561 = vmatpush1.msra.mxu0 %v147
  %562 = vmatprep.subr.mxu0 0.0
  %563 = vmatpush1.msra.mxu0 %v142
  %564 = vmatprep.subr.mxu0 0.0
  %565 = vmatpush1.msra.mxu0 %v137
  %566 = vmatprep.subr.mxu0 0.0
  %567 = vmatpush1.msra.mxu0 %v132
  %568 = vmatprep.subr.mxu0 0.0
  %569 = vmatpush1.msra.mxu0 %v127
  %570 = vmatprep.subr.mxu0 0.0
  %571 = vmatpush1.msra.mxu0 %v122
  %572 = vmatprep.subr.mxu0 0.0
  %573 = vmatpush2.msra.mxu0 0.0
  %574 = vmatprep.subr.mxu0 0.0
  %575 = vmatpush2.msra.mxu0 0.0
  %576 = vmatprep.subr.mxu0 0.0
  %577 = vmatpush2.msra.mxu0 0.0
  %578 = vmatprep.subr.mxu0 0.0
  %579 = vmatpush2.msra.mxu0 0.0
  %580 = vmatprep.subr.mxu0 0.0
  %581 = vmatpush2.msra.mxu0 0.0
  %582 = vmatprep.subr.mxu0 0.0
  %583 = vmatpush2.msra.mxu0 0.0
  %584 = vmatprep.subr.mxu0 0.0
  %585 = vmatpush2.msra.mxu0 0.0
  %586 = vmatprep.subr.mxu0 0.0
  %587 = vmatpush2.msra.mxu0 0.0
  %588 = vmatprep.subr.mxu0 0.0
  %589 = vmatpush2.msra.mxu0 0.0
  %590 = vmatprep.subr.mxu0 0.0
  %591 = vmatpush2.msra.mxu0 0.0
  %592 = vmatprep.subr.mxu0 0.0
  %593 = vmatpush2.msra.mxu0 0.0
  %594 = vmatprep.subr.mxu0 0.0
  %595 = vmatpush2.msra.mxu0 0.0
  %596 = vmatprep.subr.mxu0 0.0
  %597 = vmatpush2.msra.mxu0 0.0
  %598 = vmatprep.subr.mxu0 0.0
  %599 = vmatpush2.msra.mxu0 0.0
  %600 = vmatprep.subr.mxu0 0.0
  %601 = vmatpush2.msra.mxu0 0.0
  %602 = vmatprep.subr.mxu0 0.0
  %603 = vmatpush2.msra.mxu0 0.0
  %604 = vmatprep.mubr.f32.mxu0 0.0
  %605 = vmatmul.mubr.f32.gmra.mxu0 %v200
  %v606 = vpop.f32.mrf.mxu0
  %v607 = vadd.f32 %v462, %v606
  %v608 = vpop.f32.mrf.mxu0
  %609 = vmatprep.mubr.f32.mxu0 0.0
  %610 = vmatmul.mubr.f32.gmra.mxu0 %v201
  %v611 = vpop.f32.mrf.mxu0
  %v612 = vadd.f32 %v467, %v611
  %v613 = vpop.f32.mrf.mxu0
  %614 = vmatprep.mubr.f32.mxu0 0.0
  %615 = vmatmul.mubr.f32.gmra.mxu0 %v202
  %v616 = vpop.f32.mrf.mxu0
  %v617 = vadd.f32 %v472, %v616
  %v618 = vpop.f32.mrf.mxu0
  %619 = vmatprep.mubr.f32.mxu0 0.0
  %620 = vmatmul.mubr.f32.gmra.mxu0 %v203
  %v621 = vpop.f32.mrf.mxu0
  %v622 = vadd.f32 %v477, %v621
  %v623 = vpop.f32.mrf.mxu0
  %624 = vmatprep.mubr.f32.mxu0 0.0
  %625 = vmatmul.mubr.f32.gmra.mxu0 %v204
  %v626 = vpop.f32.mrf.mxu0
  %v627 = vadd.f32 %v482, %v626
  %v628 = vpop.f32.mrf.mxu0
  %629 = vmatprep.mubr.f32.mxu0 0.0
  %630 = vmatmul.mubr.f32.gmra.mxu0 %v205
  %v631 = vpop.f32.mrf.mxu0
  %v632 = vadd.f32 %v487, %v631
  %v633 = vpop.f32.mrf.mxu0
  %634 = vmatprep.mubr.f32.mxu0 0.0
  %635 = vmatmul.mubr.f32.gmra.mxu0 %v206
  %v636 = vpop.f32.mrf.mxu0
  %v637 = vadd.f32 %v492, %v636
  %v638 = vpop.f32.mrf.mxu0
  %639 = vmatprep.mubr.f32.mxu0 0.0
  %640 = vmatmul.mubr.f32.gmra.mxu0 %v207
  %v641 = vpop.f32.mrf.mxu0
  %v642 = vadd.f32 %v497, %v641
  %v643 = vpop.f32.mrf.mxu0
  %644 = vmatprep.mubr.f32.mxu0 0.0
  %645 = vmatmul.mubr.f32.gmra.mxu0 %v208
  %v646 = vpop.f32.mrf.mxu0
  %v647 = vadd.f32 %v502, %v646
  %v648 = vpop.f32.mrf.mxu0
  %649 = vmatprep.mubr.f32.mxu0 0.0
  %650 = vmatmul.mubr.f32.gmra.mxu0 %v209
  %v651 = vpop.f32.mrf.mxu0
  %v652 = vadd.f32 %v507, %v651
  %v653 = vpop.f32.mrf.mxu0
  %654 = vmatprep.mubr.f32.mxu0 0.0
  %655 = vmatmul.mubr.f32.gmra.mxu0 %v210
  %v656 = vpop.f32.mrf.mxu0
  %v657 = vadd.f32 %v512, %v656
  %v658 = vpop.f32.mrf.mxu0
  %659 = vmatprep.mubr.f32.mxu0 0.0
  %660 = vmatmul.mubr.f32.gmra.mxu0 %v211
  %v661 = vpop.f32.mrf.mxu0
  %v662 = vadd.f32 %v517, %v661
  %v663 = vpop.f32.mrf.mxu0
  %664 = vmatprep.mubr.f32.mxu0 0.0
  %665 = vmatmul.mubr.f32.gmra.mxu0 %v212
  %v666 = vpop.f32.mrf.mxu0
  %v667 = vadd.f32 %v522, %v666
  %v668 = vpop.f32.mrf.mxu0
  %669 = vmatprep.mubr.f32.mxu0 0.0
  %670 = vmatmul.mubr.f32.gmra.mxu0 %v213
  %v671 = vpop.f32.mrf.mxu0
  %v672 = vadd.f32 %v527, %v671
  %v673 = vpop.f32.mrf.mxu0
  %674 = vmatprep.mubr.f32.mxu0 0.0
  %675 = vmatmul.mubr.f32.gmra.mxu0 %v214
  %v676 = vpop.f32.mrf.mxu0
  %v677 = vadd.f32 %v532, %v676
  %v678 = vpop.f32.mrf.mxu0
  %679 = vmatprep.mubr.f32.mxu0 0.0
  %680 = vmatmul.mubr.f32.gmra.mxu0 %v215
  %v681 = vpop.f32.mrf.mxu0
  %v682 = vadd.f32 %v537, %v681
  %v683 = vpop.f32.mrf.mxu0
  %684 = vdwg.mxu0
  %s685 = scalar_lea.vmem %s2, 256
  %v686 = vld [vmem:[%s685] sm:$0xff]
  %v687 = vld [vmem:[%s685 + $0x8] sm:$0xff]
  %v688 = vld [vmem:[%s685 + $0x10] sm:$0xff]
  %v689 = vld [vmem:[%s685 + $0x18] sm:$0xff]
  %v690 = vld [vmem:[%s685 + $0x20] sm:$0xff]
  %v691 = vld [vmem:[%s685 + $0x28] sm:$0xff]
  %v692 = vld [vmem:[%s685 + $0x30] sm:$0xff]
  %v693 = vld [vmem:[%s685 + $0x38] sm:$0xff]
  %v694 = vld [vmem:[%s685 + $0x40] sm:$0xff]
  %v695 = vld [vmem:[%s685 + $0x48] sm:$0xff]
  %v696 = vld [vmem:[%s685 + $0x50] sm:$0xff]
  %v697 = vld [vmem:[%s685 + $0x58] sm:$0xff]
  %v698 = vld [vmem:[%s685 + $0x60] sm:$0xff]
  %v699 = vld [vmem:[%s685 + $0x68] sm:$0xff]
  %v700 = vld [vmem:[%s685 + $0x70] sm:$0xff]
  %v701 = vld [vmem:[%s685 + $0x78] sm:$0xff]
  %702 = vmatprep.subr.mxu0 0.0
  %703 = vmatpush1.msra.mxu0 %v701
  %704 = vmatprep.subr.mxu0 0.0
  %705 = vmatpush1.msra.mxu0 %v700
  %706 = vmatprep.subr.mxu0 0.0
  %707 = vmatpush1.msra.mxu0 %v699
  %708 = vmatprep.subr.mxu0 0.0
  %709 = vmatpush1.msra.mxu0 %v698
  %710 = vmatprep.subr.mxu0 0.0
  %711 = vmatpush1.msra.mxu0 %v697
  %712 = vmatprep.subr.mxu0 0.0
  %713 = vmatpush1.msra.mxu0 %v696
  %714 = vmatprep.subr.mxu0 0.0
  %715 = vmatpush1.msra.mxu0 %v695
  %716 = vmatprep.subr.mxu0 0.0
  %717 = vmatpush1.msra.mxu0 %v694
  %718 = vmatprep.subr.mxu0 0.0
  %719 = vmatpush1.msra.mxu0 %v693
  %720 = vmatprep.subr.mxu0 0.0
  %721 = vmatpush1.msra.mxu0 %v692
  %722 = vmatprep.subr.mxu0 0.0
  %723 = vmatpush1.msra.mxu0 %v691
  %724 = vmatprep.subr.mxu0 0.0
  %725 = vmatpush1.msra.mxu0 %v690
  %726 = vmatprep.subr.mxu0 0.0
  %727 = vmatpush1.msra.mxu0 %v689
  %728 = vmatprep.subr.mxu0 0.0
  %729 = vmatpush1.msra.mxu0 %v688
  %730 = vmatprep.subr.mxu0 0.0
  %731 = vmatpush1.msra.mxu0 %v687
  %732 = vmatprep.subr.mxu0 0.0
  %733 = vmatpush1.msra.mxu0 %v686
  %734 = vmatprep.subr.mxu0 0.0
  %735 = vmatpush2.msra.mxu0 0.0
  %736 = vmatprep.subr.mxu0 0.0
  %737 = vmatpush2.msra.mxu0 0.0
  %738 = vmatprep.subr.mxu0 0.0
  %739 = vmatpush2.msra.mxu0 0.0
  %740 = vmatprep.subr.mxu0 0.0
  %741 = vmatpush2.msra.mxu0 0.0
  %742 = vmatprep.subr.mxu0 0.0
  %743 = vmatpush2.msra.mxu0 0.0
  %744 = vmatprep.subr.mxu0 0.0
  %745 = vmatpush2.msra.mxu0 0.0
  %746 = vmatprep.subr.mxu0 0.0
  %747 = vmatpush2.msra.mxu0 0.0
  %748 = vmatprep.subr.mxu0 0.0
  %749 = vmatpush2.msra.mxu0 0.0
  %750 = vmatprep.subr.mxu0 0.0
  %751 = vmatpush2.msra.mxu0 0.0
  %752 = vmatprep.subr.mxu0 0.0
  %753 = vmatpush2.msra.mxu0 0.0
  %754 = vmatprep.subr.mxu0 0.0
  %755 = vmatpush2.msra.mxu0 0.0
  %756 = vmatprep.subr.mxu0 0.0
  %757 = vmatpush2.msra.mxu0 0.0
  %758 = vmatprep.subr.mxu0 0.0
  %759 = vmatpush2.msra.mxu0 0.0
  %760 = vmatprep.subr.mxu0 0.0
  %761 = vmatpush2.msra.mxu0 0.0
  %762 = vmatprep.subr.mxu0 0.0
  %763 = vmatpush2.msra.mxu0 0.0
  %764 = vmatprep.subr.mxu0 0.0
  %765 = vmatpush2.msra.mxu0 0.0
  %766 = vmatprep.mubr.f32.mxu0 0.0
  %767 = vmatmul.mubr.f32.gmra.mxu0 %v23
  %v768 = vpop.f32.mrf.mxu0
  %v769 = vadd.f32 0.0, %v768
  %v770 = vpop.f32.mrf.mxu0
  %771 = vmatprep.mubr.f32.mxu0 0.0
  %772 = vmatmul.mubr.f32.gmra.mxu0 %v24
  %v773 = vpop.f32.mrf.mxu0
  %v774 = vadd.f32 0.0, %v773
  %v775 = vpop.f32.mrf.mxu0
  %776 = vmatprep.mubr.f32.mxu0 0.0
  %777 = vmatmul.mubr.f32.gmra.mxu0 %v25
  %v778 = vpop.f32.mrf.mxu0
  %v779 = vadd.f32 0.0, %v778
  %v780 = vpop.f32.mrf.mxu0
  %781 = vmatprep.mubr.f32.mxu0 0.0
  %782 = vmatmul.mubr.f32.gmra.mxu0 %v26
  %v783 = vpop.f32.mrf.mxu0
  %v784 = vadd.f32 0.0, %v783
  %v785 = vpop.f32.mrf.mxu0
  %786 = vmatprep.mubr.f32.mxu0 0.0
  %787 = vmatmul.mubr.f32.gmra.mxu0 %v27
  %v788 = vpop.f32.mrf.mxu0
  %v789 = vadd.f32 0.0, %v788
  %v790 = vpop.f32.mrf.mxu0
  %791 = vmatprep.mubr.f32.mxu0 0.0
  %792 = vmatmul.mubr.f32.gmra.mxu0 %v28
  %v793 = vpop.f32.mrf.mxu0
  %v794 = vadd.f32 0.0, %v793
  %v795 = vpop.f32.mrf.mxu0
  %796 = vmatprep.mubr.f32.mxu0 0.0
  %797 = vmatmul.mubr.f32.gmra.mxu0 %v29
  %v798 = vpop.f32.mrf.mxu0
  %v799 = vadd.f32 0.0, %v798
  %v800 = vpop.f32.mrf.mxu0
  %801 = vmatprep.mubr.f32.mxu0 0.0
  %802 = vmatmul.mubr.f32.gmra.mxu0 %v30
  %v803 = vpop.f32.mrf.mxu0
  %v804 = vadd.f32 0.0, %v803
  %v805 = vpop.f32.mrf.mxu0
  %806 = vmatprep.mubr.f32.mxu0 0.0
  %807 = vmatmul.mubr.f32.gmra.mxu0 %v31
  %v808 = vpop.f32.mrf.mxu0
  %v809 = vadd.f32 0.0, %v808
  %v810 = vpop.f32.mrf.mxu0
  %811 = vmatprep.mubr.f32.mxu0 0.0
  %812 = vmatmul.mubr.f32.gmra.mxu0 %v32
  %v813 = vpop.f32.mrf.mxu0
  %v814 = vadd.f32 0.0, %v813
  %v815 = vpop.f32.mrf.mxu0
  %816 = vmatprep.mubr.f32.mxu0 0.0
  %817 = vmatmul.mubr.f32.gmra.mxu0 %v33
  %v818 = vpop.f32.mrf.mxu0
  %v819 = vadd.f32 0.0, %v818
  %v820 = vpop.f32.mrf.mxu0
  %821 = vmatprep.mubr.f32.mxu0 0.0
  %822 = vmatmul.mubr.f32.gmra.mxu0 %v34
  %v823 = vpop.f32.mrf.mxu0
  %v824 = vadd.f32 0.0, %v823
  %v825 = vpop.f32.mrf.mxu0
  %826 = vmatprep.mubr.f32.mxu0 0.0
  %827 = vmatmul.mubr.f32.gmra.mxu0 %v35
  %v828 = vpop.f32.mrf.mxu0
  %v829 = vadd.f32 0.0, %v828
  %v830 = vpop.f32.mrf.mxu0
  %831 = vmatprep.mubr.f32.mxu0 0.0
  %832 = vmatmul.mubr.f32.gmra.mxu0 %v36
  %v833 = vpop.f32.mrf.mxu0
  %v834 = vadd.f32 0.0, %v833
  %v835 = vpop.f32.mrf.mxu0
  %836 = vmatprep.mubr.f32.mxu0 0.0
  %837 = vmatmul.mubr.f32.gmra.mxu0 %v37
  %v838 = vpop.f32.mrf.mxu0
  %v839 = vadd.f32 0.0, %v838
  %v840 = vpop.f32.mrf.mxu0
  %841 = vmatprep.mubr.f32.mxu0 0.0
  %842 = vmatmul.mubr.f32.gmra.mxu0 %v38
  %v843 = vpop.f32.mrf.mxu0
  %v844 = vadd.f32 0.0, %v843
  %v845 = vpop.f32.mrf.mxu0
  %846 = vdwg.mxu0
  %s847 = scalar_lea.vmem %s0, 256
  %v848 = vld [vmem:[%s847] sm:$0xff]
  %v849 = vld [vmem:[%s847 + $0x8] sm:$0xff]
  %v850 = vld [vmem:[%s847 + $0x10] sm:$0xff]
  %v851 = vld [vmem:[%s847 + $0x18] sm:$0xff]
  %v852 = vld [vmem:[%s847 + $0x20] sm:$0xff]
  %v853 = vld [vmem:[%s847 + $0x28] sm:$0xff]
  %v854 = vld [vmem:[%s847 + $0x30] sm:$0xff]
  %v855 = vld [vmem:[%s847 + $0x38] sm:$0xff]
  %v856 = vld [vmem:[%s847 + $0x40] sm:$0xff]
  %v857 = vld [vmem:[%s847 + $0x48] sm:$0xff]
  %v858 = vld [vmem:[%s847 + $0x50] sm:$0xff]
  %v859 = vld [vmem:[%s847 + $0x58] sm:$0xff]
  %v860 = vld [vmem:[%s847 + $0x60] sm:$0xff]
  %v861 = vld [vmem:[%s847 + $0x68] sm:$0xff]
  %v862 = vld [vmem:[%s847 + $0x70] sm:$0xff]
  %v863 = vld [vmem:[%s847 + $0x78] sm:$0xff]
  %864 = vmatprep.subr.mxu0 0.0
  %865 = vmatpush1.msra.mxu0 %v844
  %866 = vmatprep.subr.mxu0 0.0
  %867 = vmatpush1.msra.mxu0 %v839
  %868 = vmatprep.subr.mxu0 0.0
  %869 = vmatpush1.msra.mxu0 %v834
  %870 = vmatprep.subr.mxu0 0.0
  %871 = vmatpush1.msra.mxu0 %v829
  %872 = vmatprep.subr.mxu0 0.0
  %873 = vmatpush1.msra.mxu0 %v824
  %874 = vmatprep.subr.mxu0 0.0
  %875 = vmatpush1.msra.mxu0 %v819
  %876 = vmatprep.subr.mxu0 0.0
  %877 = vmatpush1.msra.mxu0 %v814
  %878 = vmatprep.subr.mxu0 0.0
  %879 = vmatpush1.msra.mxu0 %v809
  %880 = vmatprep.subr.mxu0 0.0
  %881 = vmatpush1.msra.mxu0 %v804
  %882 = vmatprep.subr.mxu0 0.0
  %883 = vmatpush1.msra.mxu0 %v799
  %884 = vmatprep.subr.mxu0 0.0
  %885 = vmatpush1.msra.mxu0 %v794
  %886 = vmatprep.subr.mxu0 0.0
  %887 = vmatpush1.msra.mxu0 %v789
  %888 = vmatprep.subr.mxu0 0.0
  %889 = vmatpush1.msra.mxu0 %v784
  %890 = vmatprep.subr.mxu0 0.0
  %891 = vmatpush1.msra.mxu0 %v779
  %892 = vmatprep.subr.mxu0 0.0
  %893 = vmatpush1.msra.mxu0 %v774
  %894 = vmatprep.subr.mxu0 0.0
  %895 = vmatpush1.msra.mxu0 %v769
  %896 = vmatprep.subr.mxu0 0.0
  %897 = vmatpush2.msra.mxu0 0.0
  %898 = vmatprep.subr.mxu0 0.0
  %899 = vmatpush2.msra.mxu0 0.0
  %900 = vmatprep.subr.mxu0 0.0
  %901 = vmatpush2.msra.mxu0 0.0
  %902 = vmatprep.subr.mxu0 0.0
  %903 = vmatpush2.msra.mxu0 0.0
  %904 = vmatprep.subr.mxu0 0.0
  %905 = vmatpush2.msra.mxu0 0.0
  %906 = vmatprep.subr.mxu0 0.0
  %907 = vmatpush2.msra.mxu0 0.0
  %908 = vmatprep.subr.mxu0 0.0
  %909 = vmatpush2.msra.mxu0 0.0
  %910 = vmatprep.subr.mxu0 0.0
  %911 = vmatpush2.msra.mxu0 0.0
  %912 = vmatprep.subr.mxu0 0.0
  %913 = vmatpush2.msra.mxu0 0.0
  %914 = vmatprep.subr.mxu0 0.0
  %915 = vmatpush2.msra.mxu0 0.0
  %916 = vmatprep.subr.mxu0 0.0
  %917 = vmatpush2.msra.mxu0 0.0
  %918 = vmatprep.subr.mxu0 0.0
  %919 = vmatpush2.msra.mxu0 0.0
  %920 = vmatprep.subr.mxu0 0.0
  %921 = vmatpush2.msra.mxu0 0.0
  %922 = vmatprep.subr.mxu0 0.0
  %923 = vmatpush2.msra.mxu0 0.0
  %924 = vmatprep.subr.mxu0 0.0
  %925 = vmatpush2.msra.mxu0 0.0
  %926 = vmatprep.subr.mxu0 0.0
  %927 = vmatpush2.msra.mxu0 0.0
  %928 = vmatprep.mubr.f32.mxu0 0.0
  %929 = vmatmul.mubr.f32.gmra.mxu0 %v848
  %v930 = vpop.f32.mrf.mxu0
  %v931 = vadd.f32 0.0, %v930
  %v932 = vpop.f32.mrf.mxu0
  %933 = vmatprep.mubr.f32.mxu0 0.0
  %934 = vmatmul.mubr.f32.gmra.mxu0 %v849
  %v935 = vpop.f32.mrf.mxu0
  %v936 = vadd.f32 0.0, %v935
  %v937 = vpop.f32.mrf.mxu0
  %938 = vmatprep.mubr.f32.mxu0 0.0
  %939 = vmatmul.mubr.f32.gmra.mxu0 %v850
  %v940 = vpop.f32.mrf.mxu0
  %v941 = vadd.f32 0.0, %v940
  %v942 = vpop.f32.mrf.mxu0
  %943 = vmatprep.mubr.f32.mxu0 0.0
  %944 = vmatmul.mubr.f32.gmra.mxu0 %v851
  %v945 = vpop.f32.mrf.mxu0
  %v946 = vadd.f32 0.0, %v945
  %v947 = vpop.f32.mrf.mxu0
  %948 = vmatprep.mubr.f32.mxu0 0.0
  %949 = vmatmul.mubr.f32.gmra.mxu0 %v852
  %v950 = vpop.f32.mrf.mxu0
  %v951 = vadd.f32 0.0, %v950
  %v952 = vpop.f32.mrf.mxu0
  %953 = vmatprep.mubr.f32.mxu0 0.0
  %954 = vmatmul.mubr.f32.gmra.mxu0 %v853
  %v955 = vpop.f32.mrf.mxu0
  %v956 = vadd.f32 0.0, %v955
  %v957 = vpop.f32.mrf.mxu0
  %958 = vmatprep.mubr.f32.mxu0 0.0
  %959 = vmatmul.mubr.f32.gmra.mxu0 %v854
  %v960 = vpop.f32.mrf.mxu0
  %v961 = vadd.f32 0.0, %v960
  %v962 = vpop.f32.mrf.mxu0
  %963 = vmatprep.mubr.f32.mxu0 0.0
  %964 = vmatmul.mubr.f32.gmra.mxu0 %v855
  %v965 = vpop.f32.mrf.mxu0
  %v966 = vadd.f32 0.0, %v965
  %v967 = vpop.f32.mrf.mxu0
  %968 = vmatprep.mubr.f32.mxu0 0.0
  %969 = vmatmul.mubr.f32.gmra.mxu0 %v856
  %v970 = vpop.f32.mrf.mxu0
  %v971 = vadd.f32 0.0, %v970
  %v972 = vpop.f32.mrf.mxu0
  %973 = vmatprep.mubr.f32.mxu0 0.0
  %974 = vmatmul.mubr.f32.gmra.mxu0 %v857
  %v975 = vpop.f32.mrf.mxu0
  %v976 = vadd.f32 0.0, %v975
  %v977 = vpop.f32.mrf.mxu0
  %978 = vmatprep.mubr.f32.mxu0 0.0
  %979 = vmatmul.mubr.f32.gmra.mxu0 %v858
  %v980 = vpop.f32.mrf.mxu0
  %v981 = vadd.f32 0.0, %v980
  %v982 = vpop.f32.mrf.mxu0
  %983 = vmatprep.mubr.f32.mxu0 0.0
  %984 = vmatmul.mubr.f32.gmra.mxu0 %v859
  %v985 = vpop.f32.mrf.mxu0
  %v986 = vadd.f32 0.0, %v985
  %v987 = vpop.f32.mrf.mxu0
  %988 = vmatprep.mubr.f32.mxu0 0.0
  %989 = vmatmul.mubr.f32.gmra.mxu0 %v860
  %v990 = vpop.f32.mrf.mxu0
  %v991 = vadd.f32 0.0, %v990
  %v992 = vpop.f32.mrf.mxu0
  %993 = vmatprep.mubr.f32.mxu0 0.0
  %994 = vmatmul.mubr.f32.gmra.mxu0 %v861
  %v995 = vpop.f32.mrf.mxu0
  %v996 = vadd.f32 0.0, %v995
  %v997 = vpop.f32.mrf.mxu0
  %998 = vmatprep.mubr.f32.mxu0 0.0
  %999 = vmatmul.mubr.f32.gmra.mxu0 %v862
  %v1000 = vpop.f32.mrf.mxu0
  %v1001 = vadd.f32 0.0, %v1000
  %v1002 = vpop.f32.mrf.mxu0
  %1003 = vmatprep.mubr.f32.mxu0 0.0
  %1004 = vmatmul.mubr.f32.gmra.mxu0 %v863
  %v1005 = vpop.f32.mrf.mxu0
  %v1006 = vadd.f32 0.0, %v1005
  %v1007 = vpop.f32.mrf.mxu0
  %1008 = vdwg.mxu0
  %v1009 = vadd.f32 %v607, %v931
  %v1010 = vadd.f32 %v612, %v936
  %v1011 = vadd.f32 %v617, %v941
  %v1012 = vadd.f32 %v622, %v946
  %v1013 = vadd.f32 %v627, %v951
  %v1014 = vadd.f32 %v632, %v956
  %v1015 = vadd.f32 %v637, %v961
  %v1016 = vadd.f32 %v642, %v966
  %v1017 = vadd.f32 %v647, %v971
  %v1018 = vadd.f32 %v652, %v976
  %v1019 = vadd.f32 %v657, %v981
  %v1020 = vadd.f32 %v662, %v986
  %v1021 = vadd.f32 %v667, %v991
  %v1022 = vadd.f32 %v672, %v996
  %v1023 = vadd.f32 %v677, %v1001
  %v1024 = vadd.f32 %v682, %v1006
  %v1025 = vld [vmem:[%s3] sm:$0x1]
  %v1027 = vlaneseq
  %v1028 = vshrl.u32 %v1027, 7
  %v1029 = vsub.s32 0, %v1028
  %v1030 = vrot.slane %v1025, %v1029
  %v1032 = vadd.f32 %v1009, %v1030
  %v1033 = vadd.f32 %v1010, %v1030
  %v1034 = vadd.f32 %v1011, %v1030
  %v1035 = vadd.f32 %v1012, %v1030
  %v1036 = vadd.f32 %v1013, %v1030
  %v1037 = vadd.f32 %v1014, %v1030
  %v1038 = vadd.f32 %v1015, %v1030
  %v1039 = vadd.f32 %v1016, %v1030
  %v1040 = vadd.f32 %v1017, %v1030
  %v1041 = vadd.f32 %v1018, %v1030
  %v1042 = vadd.f32 %v1019, %v1030
  %v1043 = vadd.f32 %v1020, %v1030
  %v1044 = vadd.f32 %v1021, %v1030
  %v1045 = vadd.f32 %v1022, %v1030
  %v1046 = vadd.f32 %v1023, %v1030
  %v1047 = vadd.f32 %v1024, %v1030
  %v1048 = vmax.f32 %v1032, 0.0
  %v1049 = vmax.f32 %v1033, 0.0
  %v1050 = vmax.f32 %v1034, 0.0
  %v1051 = vmax.f32 %v1035, 0.0
  %v1052 = vmax.f32 %v1036, 0.0
  %v1053 = vmax.f32 %v1037, 0.0
  %v1054 = vmax.f32 %v1038, 0.0
  %v1055 = vmax.f32 %v1039, 0.0
  %v1056 = vmax.f32 %v1040, 0.0
  %v1057 = vmax.f32 %v1041, 0.0
  %v1058 = vmax.f32 %v1042, 0.0
  %v1059 = vmax.f32 %v1043, 0.0
  %v1060 = vmax.f32 %v1044, 0.0
  %v1061 = vmax.f32 %v1045, 0.0
  %v1062 = vmax.f32 %v1046, 0.0
  %v1063 = vmax.f32 %v1047, 0.0
  %v1064 = vld [vmem:[%s4] sm:$0xff]
  %v1065 = vld [vmem:[%s4 + $0x8] sm:$0xff]
  %v1066 = vld [vmem:[%s4 + $0x10] sm:$0xff]
  %v1067 = vld [vmem:[%s4 + $0x18] sm:$0xff]
  %v1068 = vld [vmem:[%s4 + $0x20] sm:$0xff]
  %v1069 = vld [vmem:[%s4 + $0x28] sm:$0xff]
  %v1070 = vld [vmem:[%s4 + $0x30] sm:$0xff]
  %v1071 = vld [vmem:[%s4 + $0x38] sm:$0xff]
  %v1072 = vld [vmem:[%s4 + $0x40] sm:$0xff]
  %v1073 = vld [vmem:[%s4 + $0x48] sm:$0xff]
  %v1074 = vld [vmem:[%s4 + $0x50] sm:$0xff]
  %v1075 = vld [vmem:[%s4 + $0x58] sm:$0xff]
  %v1076 = vld [vmem:[%s4 + $0x60] sm:$0xff]
  %v1077 = vld [vmem:[%s4 + $0x68] sm:$0xff]
  %v1078 = vld [vmem:[%s4 + $0x70] sm:$0xff]
  %v1079 = vld [vmem:[%s4 + $0x78] sm:$0xff]
  %1080 = vmatprep.subr.mxu0 0.0
  %1081 = vmatpush1.msra.mxu0 %v1079
  %1082 = vmatprep.subr.mxu0 0.0
  %1083 = vmatpush1.msra.mxu0 %v1078
  %1084 = vmatprep.subr.mxu0 0.0
  %1085 = vmatpush1.msra.mxu0 %v1077
  %1086 = vmatprep.subr.mxu0 0.0
  %1087 = vmatpush1.msra.mxu0 %v1076
  %1088 = vmatprep.subr.mxu0 0.0
  %1089 = vmatpush1.msra.mxu0 %v1075
  %1090 = vmatprep.subr.mxu0 0.0
  %1091 = vmatpush1.msra.mxu0 %v1074
  %1092 = vmatprep.subr.mxu0 0.0
  %1093 = vmatpush1.msra.mxu0 %v1073
  %1094 = vmatprep.subr.mxu0 0.0
  %1095 = vmatpush1.msra.mxu0 %v1072
  %1096 = vmatprep.subr.mxu0 0.0
  %1097 = vmatpush1.msra.mxu0 %v1071
  %1098 = vmatprep.subr.mxu0 0.0
  %1099 = vmatpush1.msra.mxu0 %v1070
  %1100 = vmatprep.subr.mxu0 0.0
  %1101 = vmatpush1.msra.mxu0 %v1069
  %1102 = vmatprep.subr.mxu0 0.0
  %1103 = vmatpush1.msra.mxu0 %v1068
  %1104 = vmatprep.subr.mxu0 0.0
  %1105 = vmatpush1.msra.mxu0 %v1067
  %1106 = vmatprep.subr.mxu0 0.0
  %1107 = vmatpush1.msra.mxu0 %v1066
  %1108 = vmatprep.subr.mxu0 0.0
  %1109 = vmatpush1.msra.mxu0 %v1065
  %1110 = vmatprep.subr.mxu0 0.0
  %1111 = vmatpush1.msra.mxu0 %v1064
  %1112 = vmatprep.subr.mxu0 0.0
  %1113 = vmatpush2.msra.mxu0 0.0
  %1114 = vmatprep.subr.mxu0 0.0
  %1115 = vmatpush2.msra.mxu0 0.0
  %1116 = vmatprep.subr.mxu0 0.0
  %1117 = vmatpush2.msra.mxu0 0.0
  %1118 = vmatprep.subr.mxu0 0.0
  %1119 = vmatpush2.msra.mxu0 0.0
  %1120 = vmatprep.subr.mxu0 0.0
  %1121 = vmatpush2.msra.mxu0 0.0
  %1122 = vmatprep.subr.mxu0 0.0
  %1123 = vmatpush2.msra.mxu0 0.0
  %1124 = vmatprep.subr.mxu0 0.0
  %1125 = vmatpush2.msra.mxu0 0.0
  %1126 = vmatprep.subr.mxu0 0.0
  %1127 = vmatpush2.msra.mxu0 0.0
  %1128 = vmatprep.subr.mxu0 0.0
  %1129 = vmatpush2.msra.mxu0 0.0
  %1130 = vmatprep.subr.mxu0 0.0
  %1131 = vmatpush2.msra.mxu0 0.0
  %1132 = vmatprep.subr.mxu0 0.0
  %1133 = vmatpush2.msra.mxu0 0.0
  %1134 = vmatprep.subr.mxu0 0.0
  %1135 = vmatpush2.msra.mxu0 0.0
  %1136 = vmatprep.subr.mxu0 0.0
  %1137 = vmatpush2.msra.mxu0 0.0
  %1138 = vmatprep.subr.mxu0 0.0
  %1139 = vmatpush2.msra.mxu0 0.0
  %1140 = vmatprep.subr.mxu0 0.0
  %1141 = vmatpush2.msra.mxu0 0.0
  %1142 = vmatprep.subr.mxu0 0.0
  %1143 = vmatpush2.msra.mxu0 0.0
  %1144 = vmatprep.mubr.f32.mxu0 0.0
  %1145 = vmatmul.mubr.f32.gmra.mxu0 %v1048
  %v1146 = vpop.f32.mrf.mxu0
  %v1147 = vadd.f32 0.0, %v1146
  %v1148 = vpop.f32.mrf.mxu0
  %1149 = vmatprep.mubr.f32.mxu0 0.0
  %1150 = vmatmul.mubr.f32.gmra.mxu0 %v1049
  %v1151 = vpop.f32.mrf.mxu0
  %v1152 = vadd.f32 0.0, %v1151
  %v1153 = vpop.f32.mrf.mxu0
  %1154 = vmatprep.mubr.f32.mxu0 0.0
  %1155 = vmatmul.mubr.f32.gmra.mxu0 %v1050
  %v1156 = vpop.f32.mrf.mxu0
  %v1157 = vadd.f32 0.0, %v1156
  %v1158 = vpop.f32.mrf.mxu0
  %1159 = vmatprep.mubr.f32.mxu0 0.0
  %1160 = vmatmul.mubr.f32.gmra.mxu0 %v1051
  %v1161 = vpop.f32.mrf.mxu0
  %v1162 = vadd.f32 0.0, %v1161
  %v1163 = vpop.f32.mrf.mxu0
  %1164 = vmatprep.mubr.f32.mxu0 0.0
  %1165 = vmatmul.mubr.f32.gmra.mxu0 %v1052
  %v1166 = vpop.f32.mrf.mxu0
  %v1167 = vadd.f32 0.0, %v1166
  %v1168 = vpop.f32.mrf.mxu0
  %1169 = vmatprep.mubr.f32.mxu0 0.0
  %1170 = vmatmul.mubr.f32.gmra.mxu0 %v1053
  %v1171 = vpop.f32.mrf.mxu0
  %v1172 = vadd.f32 0.0, %v1171
  %v1173 = vpop.f32.mrf.mxu0
  %1174 = vmatprep.mubr.f32.mxu0 0.0
  %1175 = vmatmul.mubr.f32.gmra.mxu0 %v1054
  %v1176 = vpop.f32.mrf.mxu0
  %v1177 = vadd.f32 0.0, %v1176
  %v1178 = vpop.f32.mrf.mxu0
  %1179 = vmatprep.mubr.f32.mxu0 0.0
  %1180 = vmatmul.mubr.f32.gmra.mxu0 %v1055
  %v1181 = vpop.f32.mrf.mxu0
  %v1182 = vadd.f32 0.0, %v1181
  %v1183 = vpop.f32.mrf.mxu0
  %1184 = vmatprep.mubr.f32.mxu0 0.0
  %1185 = vmatmul.mubr.f32.gmra.mxu0 %v1056
  %v1186 = vpop.f32.mrf.mxu0
  %v1187 = vadd.f32 0.0, %v1186
  %v1188 = vpop.f32.mrf.mxu0
  %1189 = vmatprep.mubr.f32.mxu0 0.0
  %1190 = vmatmul.mubr.f32.gmra.mxu0 %v1057
  %v1191 = vpop.f32.mrf.mxu0
  %v1192 = vadd.f32 0.0, %v1191
  %v1193 = vpop.f32.mrf.mxu0
  %1194 = vmatprep.mubr.f32.mxu0 0.0
  %1195 = vmatmul.mubr.f32.gmra.mxu0 %v1058
  %v1196 = vpop.f32.mrf.mxu0
  %v1197 = vadd.f32 0.0, %v1196
  %v1198 = vpop.f32.mrf.mxu0
  %1199 = vmatprep.mubr.f32.mxu0 0.0
  %1200 = vmatmul.mubr.f32.gmra.mxu0 %v1059
  %v1201 = vpop.f32.mrf.mxu0
  %v1202 = vadd.f32 0.0, %v1201
  %v1203 = vpop.f32.mrf.mxu0
  %1204 = vmatprep.mubr.f32.mxu0 0.0
  %1205 = vmatmul.mubr.f32.gmra.mxu0 %v1060
  %v1206 = vpop.f32.mrf.mxu0
  %v1207 = vadd.f32 0.0, %v1206
  %v1208 = vpop.f32.mrf.mxu0
  %1209 = vmatprep.mubr.f32.mxu0 0.0
  %1210 = vmatmul.mubr.f32.gmra.mxu0 %v1061
  %v1211 = vpop.f32.mrf.mxu0
  %v1212 = vadd.f32 0.0, %v1211
  %v1213 = vpop.f32.mrf.mxu0
  %1214 = vmatprep.mubr.f32.mxu0 0.0
  %1215 = vmatmul.mubr.f32.gmra.mxu0 %v1062
  %v1216 = vpop.f32.mrf.mxu0
  %v1217 = vadd.f32 0.0, %v1216
  %v1218 = vpop.f32.mrf.mxu0
  %1219 = vmatprep.mubr.f32.mxu0 0.0
  %1220 = vmatmul.mubr.f32.gmra.mxu0 %v1063
  %v1221 = vpop.f32.mrf.mxu0
  %v1222 = vadd.f32 0.0, %v1221
  %v1223 = vpop.f32.mrf.mxu0
  %1224 = vdwg.mxu0
  %s1225 = scalar_lea.vmem %s4, 128
  %v1226 = vld [vmem:[%s1225] sm:$0xff]
  %v1227 = vld [vmem:[%s1225 + $0x8] sm:$0xff]
  %v1228 = vld [vmem:[%s1225 + $0x10] sm:$0xff]
  %v1229 = vld [vmem:[%s1225 + $0x18] sm:$0xff]
  %v1230 = vld [vmem:[%s1225 + $0x20] sm:$0xff]
  %v1231 = vld [vmem:[%s1225 + $0x28] sm:$0xff]
  %v1232 = vld [vmem:[%s1225 + $0x30] sm:$0xff]
  %v1233 = vld [vmem:[%s1225 + $0x38] sm:$0xff]
  %v1234 = vld [vmem:[%s1225 + $0x40] sm:$0xff]
  %v1235 = vld [vmem:[%s1225 + $0x48] sm:$0xff]
  %v1236 = vld [vmem:[%s1225 + $0x50] sm:$0xff]
  %v1237 = vld [vmem:[%s1225 + $0x58] sm:$0xff]
  %v1238 = vld [vmem:[%s1225 + $0x60] sm:$0xff]
  %v1239 = vld [vmem:[%s1225 + $0x68] sm:$0xff]
  %v1240 = vld [vmem:[%s1225 + $0x70] sm:$0xff]
  %v1241 = vld [vmem:[%s1225 + $0x78] sm:$0xff]
  %1242 = vmatprep.subr.mxu0 0.0
  %1243 = vmatpush1.msra.mxu0 %v1241
  %1244 = vmatprep.subr.mxu0 0.0
  %1245 = vmatpush1.msra.mxu0 %v1240
  %1246 = vmatprep.subr.mxu0 0.0
  %1247 = vmatpush1.msra.mxu0 %v1239
  %1248 = vmatprep.subr.mxu0 0.0
  %1249 = vmatpush1.msra.mxu0 %v1238
  %1250 = vmatprep.subr.mxu0 0.0
  %1251 = vmatpush1.msra.mxu0 %v1237
  %1252 = vmatprep.subr.mxu0 0.0
  %1253 = vmatpush1.msra.mxu0 %v1236
  %1254 = vmatprep.subr.mxu0 0.0
  %1255 = vmatpush1.msra.mxu0 %v1235
  %1256 = vmatprep.subr.mxu0 0.0
  %1257 = vmatpush1.msra.mxu0 %v1234
  %1258 = vmatprep.subr.mxu0 0.0
  %1259 = vmatpush1.msra.mxu0 %v1233
  %1260 = vmatprep.subr.mxu0 0.0
  %1261 = vmatpush1.msra.mxu0 %v1232
  %1262 = vmatprep.subr.mxu0 0.0
  %1263 = vmatpush1.msra.mxu0 %v1231
  %1264 = vmatprep.subr.mxu0 0.0
  %1265 = vmatpush1.msra.mxu0 %v1230
  %1266 = vmatprep.subr.mxu0 0.0
  %1267 = vmatpush1.msra.mxu0 %v1229
  %1268 = vmatprep.subr.mxu0 0.0
  %1269 = vmatpush1.msra.mxu0 %v1228
  %1270 = vmatprep.subr.mxu0 0.0
  %1271 = vmatpush1.msra.mxu0 %v1227
  %1272 = vmatprep.subr.mxu0 0.0
  %1273 = vmatpush1.msra.mxu0 %v1226
  %1274 = vmatprep.subr.mxu0 0.0
  %1275 = vmatpush2.msra.mxu0 0.0
  %1276 = vmatprep.subr.mxu0 0.0
  %1277 = vmatpush2.msra.mxu0 0.0
  %1278 = vmatprep.subr.mxu0 0.0
  %1279 = vmatpush2.msra.mxu0 0.0
  %1280 = vmatprep.subr.mxu0 0.0
  %1281 = vmatpush2.msra.mxu0 0.0
  %1282 = vmatprep.subr.mxu0 0.0
  %1283 = vmatpush2.msra.mxu0 0.0
  %1284 = vmatprep.subr.mxu0 0.0
  %1285 = vmatpush2.msra.mxu0 0.0
  %1286 = vmatprep.subr.mxu0 0.0
  %1287 = vmatpush2.msra.mxu0 0.0
  %1288 = vmatprep.subr.mxu0 0.0
  %1289 = vmatpush2.msra.mxu0 0.0
  %1290 = vmatprep.subr.mxu0 0.0
  %1291 = vmatpush2.msra.mxu0 0.0
  %1292 = vmatprep.subr.mxu0 0.0
  %1293 = vmatpush2.msra.mxu0 0.0
  %1294 = vmatprep.subr.mxu0 0.0
  %1295 = vmatpush2.msra.mxu0 0.0
  %1296 = vmatprep.subr.mxu0 0.0
  %1297 = vmatpush2.msra.mxu0 0.0
  %1298 = vmatprep.subr.mxu0 0.0
  %1299 = vmatpush2.msra.mxu0 0.0
  %1300 = vmatprep.subr.mxu0 0.0
  %1301 = vmatpush2.msra.mxu0 0.0
  %1302 = vmatprep.subr.mxu0 0.0
  %1303 = vmatpush2.msra.mxu0 0.0
  %1304 = vmatprep.subr.mxu0 0.0
  %1305 = vmatpush2.msra.mxu0 0.0
  %1306 = vmatprep.mubr.f32.mxu0 0.0
  %1307 = vmatmul.mubr.f32.gmra.mxu0 %v1048
  %v1308 = vpop.f32.mrf.mxu0
  %v1309 = vadd.f32 0.0, %v1308
  %v1310 = vpop.f32.mrf.mxu0
  %1311 = vmatprep.mubr.f32.mxu0 0.0
  %1312 = vmatmul.mubr.f32.gmra.mxu0 %v1049
  %v1313 = vpop.f32.mrf.mxu0
  %v1314 = vadd.f32 0.0, %v1313
  %v1315 = vpop.f32.mrf.mxu0
  %1316 = vmatprep.mubr.f32.mxu0 0.0
  %1317 = vmatmul.mubr.f32.gmra.mxu0 %v1050
  %v1318 = vpop.f32.mrf.mxu0
  %v1319 = vadd.f32 0.0, %v1318
  %v1320 = vpop.f32.mrf.mxu0
  %1321 = vmatprep.mubr.f32.mxu0 0.0
  %1322 = vmatmul.mubr.f32.gmra.mxu0 %v1051
  %v1323 = vpop.f32.mrf.mxu0
  %v1324 = vadd.f32 0.0, %v1323
  %v1325 = vpop.f32.mrf.mxu0
  %1326 = vmatprep.mubr.f32.mxu0 0.0
  %1327 = vmatmul.mubr.f32.gmra.mxu0 %v1052
  %v1328 = vpop.f32.mrf.mxu0
  %v1329 = vadd.f32 0.0, %v1328
  %v1330 = vpop.f32.mrf.mxu0
  %1331 = vmatprep.mubr.f32.mxu0 0.0
  %1332 = vmatmul.mubr.f32.gmra.mxu0 %v1053
  %v1333 = vpop.f32.mrf.mxu0
  %v1334 = vadd.f32 0.0, %v1333
  %v1335 = vpop.f32.mrf.mxu0
  %1336 = vmatprep.mubr.f32.mxu0 0.0
  %1337 = vmatmul.mubr.f32.gmra.mxu0 %v1054
  %v1338 = vpop.f32.mrf.mxu0
  %v1339 = vadd.f32 0.0, %v1338
  %v1340 = vpop.f32.mrf.mxu0
  %1341 = vmatprep.mubr.f32.mxu0 0.0
  %1342 = vmatmul.mubr.f32.gmra.mxu0 %v1055
  %v1343 = vpop.f32.mrf.mxu0
  %v1344 = vadd.f32 0.0, %v1343
  %v1345 = vpop.f32.mrf.mxu0
  %1346 = vmatprep.mubr.f32.mxu0 0.0
  %1347 = vmatmul.mubr.f32.gmra.mxu0 %v1056
  %v1348 = vpop.f32.mrf.mxu0
  %v1349 = vadd.f32 0.0, %v1348
  %v1350 = vpop.f32.mrf.mxu0
  %1351 = vmatprep.mubr.f32.mxu0 0.0
  %1352 = vmatmul.mubr.f32.gmra.mxu0 %v1057
  %v1353 = vpop.f32.mrf.mxu0
  %v1354 = vadd.f32 0.0, %v1353
  %v1355 = vpop.f32.mrf.mxu0
  %1356 = vmatprep.mubr.f32.mxu0 0.0
  %1357 = vmatmul.mubr.f32.gmra.mxu0 %v1058
  %v1358 = vpop.f32.mrf.mxu0
  %v1359 = vadd.f32 0.0, %v1358
  %v1360 = vpop.f32.mrf.mxu0
  %1361 = vmatprep.mubr.f32.mxu0 0.0
  %1362 = vmatmul.mubr.f32.gmra.mxu0 %v1059
  %v1363 = vpop.f32.mrf.mxu0
  %v1364 = vadd.f32 0.0, %v1363
  %v1365 = vpop.f32.mrf.mxu0
  %1366 = vmatprep.mubr.f32.mxu0 0.0
  %1367 = vmatmul.mubr.f32.gmra.mxu0 %v1060
  %v1368 = vpop.f32.mrf.mxu0
  %v1369 = vadd.f32 0.0, %v1368
  %v1370 = vpop.f32.mrf.mxu0
  %1371 = vmatprep.mubr.f32.mxu0 0.0
  %1372 = vmatmul.mubr.f32.gmra.mxu0 %v1061
  %v1373 = vpop.f32.mrf.mxu0
  %v1374 = vadd.f32 0.0, %v1373
  %v1375 = vpop.f32.mrf.mxu0
  %1376 = vmatprep.mubr.f32.mxu0 0.0
  %1377 = vmatmul.mubr.f32.gmra.mxu0 %v1062
  %v1378 = vpop.f32.mrf.mxu0
  %v1379 = vadd.f32 0.0, %v1378
  %v1380 = vpop.f32.mrf.mxu0
  %1381 = vmatprep.mubr.f32.mxu0 0.0
  %1382 = vmatmul.mubr.f32.gmra.mxu0 %v1063
  %v1383 = vpop.f32.mrf.mxu0
  %v1384 = vadd.f32 0.0, %v1383
  %v1385 = vpop.f32.mrf.mxu0
  %1386 = vdwg.mxu0
  %1387 = vmatprep.subr.mxu0 0.0
  %1388 = vmatpush1.msra.mxu0 %v1384
  %1389 = vmatprep.subr.mxu0 0.0
  %1390 = vmatpush1.msra.mxu0 %v1379
  %1391 = vmatprep.subr.mxu0 0.0
  %1392 = vmatpush1.msra.mxu0 %v1374
  %1393 = vmatprep.subr.mxu0 0.0
  %1394 = vmatpush1.msra.mxu0 %v1369
  %1395 = vmatprep.subr.mxu0 0.0
  %1396 = vmatpush1.msra.mxu0 %v1364
  %1397 = vmatprep.subr.mxu0 0.0
  %1398 = vmatpush1.msra.mxu0 %v1359
  %1399 = vmatprep.subr.mxu0 0.0
  %1400 = vmatpush1.msra.mxu0 %v1354
  %1401 = vmatprep.subr.mxu0 0.0
  %1402 = vmatpush1.msra.mxu0 %v1349
  %1403 = vmatprep.subr.mxu0 0.0
  %1404 = vmatpush1.msra.mxu0 %v1344
  %1405 = vmatprep.subr.mxu0 0.0
  %1406 = vmatpush1.msra.mxu0 %v1339
  %1407 = vmatprep.subr.mxu0 0.0
  %1408 = vmatpush1.msra.mxu0 %v1334
  %1409 = vmatprep.subr.mxu0 0.0
  %1410 = vmatpush1.msra.mxu0 %v1329
  %1411 = vmatprep.subr.mxu0 0.0
  %1412 = vmatpush1.msra.mxu0 %v1324
  %1413 = vmatprep.subr.mxu0 0.0
  %1414 = vmatpush1.msra.mxu0 %v1319
  %1415 = vmatprep.subr.mxu0 0.0
  %1416 = vmatpush1.msra.mxu0 %v1314
  %1417 = vmatprep.subr.mxu0 0.0
  %1418 = vmatpush1.msra.mxu0 %v1309
  %1419 = vmatprep.subr.mxu0 0.0
  %1420 = vmatpush2.msra.mxu0 0.0
  %1421 = vmatprep.subr.mxu0 0.0
  %1422 = vmatpush2.msra.mxu0 0.0
  %1423 = vmatprep.subr.mxu0 0.0
  %1424 = vmatpush2.msra.mxu0 0.0
  %1425 = vmatprep.subr.mxu0 0.0
  %1426 = vmatpush2.msra.mxu0 0.0
  %1427 = vmatprep.subr.mxu0 0.0
  %1428 = vmatpush2.msra.mxu0 0.0
  %1429 = vmatprep.subr.mxu0 0.0
  %1430 = vmatpush2.msra.mxu0 0.0
  %1431 = vmatprep.subr.mxu0 0.0
  %1432 = vmatpush2.msra.mxu0 0.0
  %1433 = vmatprep.subr.mxu0 0.0
  %1434 = vmatpush2.msra.mxu0 0.0
  %1435 = vmatprep.subr.mxu0 0.0
  %1436 = vmatpush2.msra.mxu0 0.0
  %1437 = vmatprep.subr.mxu0 0.0
  %1438 = vmatpush2.msra.mxu0 0.0
  %1439 = vmatprep.subr.mxu0 0.0
  %1440 = vmatpush2.msra.mxu0 0.0
  %1441 = vmatprep.subr.mxu0 0.0
  %1442 = vmatpush2.msra.mxu0 0.0
  %1443 = vmatprep.subr.mxu0 0.0
  %1444 = vmatpush2.msra.mxu0 0.0
  %1445 = vmatprep.subr.mxu0 0.0
  %1446 = vmatpush2.msra.mxu0 0.0
  %1447 = vmatprep.subr.mxu0 0.0
  %1448 = vmatpush2.msra.mxu0 0.0
  %1449 = vmatprep.subr.mxu0 0.0
  %1450 = vmatpush2.msra.mxu0 0.0
  %1451 = vmatprep.mubr.f32.mxu0 0.0
  %1452 = vmatmul.mubr.f32.gmra.mxu0 %v379
  %v1453 = vpop.f32.mrf.mxu0
  %v1454 = vadd.f32 0.0, %v1453
  %v1455 = vpop.f32.mrf.mxu0
  %1456 = vmatprep.mubr.f32.mxu0 0.0
  %1457 = vmatmul.mubr.f32.gmra.mxu0 %v380
  %v1458 = vpop.f32.mrf.mxu0
  %v1459 = vadd.f32 0.0, %v1458
  %v1460 = vpop.f32.mrf.mxu0
  %1461 = vmatprep.mubr.f32.mxu0 0.0
  %1462 = vmatmul.mubr.f32.gmra.mxu0 %v381
  %v1463 = vpop.f32.mrf.mxu0
  %v1464 = vadd.f32 0.0, %v1463
  %v1465 = vpop.f32.mrf.mxu0
  %1466 = vmatprep.mubr.f32.mxu0 0.0
  %1467 = vmatmul.mubr.f32.gmra.mxu0 %v382
  %v1468 = vpop.f32.mrf.mxu0
  %v1469 = vadd.f32 0.0, %v1468
  %v1470 = vpop.f32.mrf.mxu0
  %1471 = vmatprep.mubr.f32.mxu0 0.0
  %1472 = vmatmul.mubr.f32.gmra.mxu0 %v383
  %v1473 = vpop.f32.mrf.mxu0
  %v1474 = vadd.f32 0.0, %v1473
  %v1475 = vpop.f32.mrf.mxu0
  %1476 = vmatprep.mubr.f32.mxu0 0.0
  %1477 = vmatmul.mubr.f32.gmra.mxu0 %v384
  %v1478 = vpop.f32.mrf.mxu0
  %v1479 = vadd.f32 0.0, %v1478
  %v1480 = vpop.f32.mrf.mxu0
  %1481 = vmatprep.mubr.f32.mxu0 0.0
  %1482 = vmatmul.mubr.f32.gmra.mxu0 %v385
  %v1483 = vpop.f32.mrf.mxu0
  %v1484 = vadd.f32 0.0, %v1483
  %v1485 = vpop.f32.mrf.mxu0
  %1486 = vmatprep.mubr.f32.mxu0 0.0
  %1487 = vmatmul.mubr.f32.gmra.mxu0 %v386
  %v1488 = vpop.f32.mrf.mxu0
  %v1489 = vadd.f32 0.0, %v1488
  %v1490 = vpop.f32.mrf.mxu0
  %1491 = vmatprep.mubr.f32.mxu0 0.0
  %1492 = vmatmul.mubr.f32.gmra.mxu0 %v387
  %v1493 = vpop.f32.mrf.mxu0
  %v1494 = vadd.f32 0.0, %v1493
  %v1495 = vpop.f32.mrf.mxu0
  %1496 = vmatprep.mubr.f32.mxu0 0.0
  %1497 = vmatmul.mubr.f32.gmra.mxu0 %v388
  %v1498 = vpop.f32.mrf.mxu0
  %v1499 = vadd.f32 0.0, %v1498
  %v1500 = vpop.f32.mrf.mxu0
  %1501 = vmatprep.mubr.f32.mxu0 0.0
  %1502 = vmatmul.mubr.f32.gmra.mxu0 %v389
  %v1503 = vpop.f32.mrf.mxu0
  %v1504 = vadd.f32 0.0, %v1503
  %v1505 = vpop.f32.mrf.mxu0
  %1506 = vmatprep.mubr.f32.mxu0 0.0
  %1507 = vmatmul.mubr.f32.gmra.mxu0 %v390
  %v1508 = vpop.f32.mrf.mxu0
  %v1509 = vadd.f32 0.0, %v1508
  %v1510 = vpop.f32.mrf.mxu0
  %1511 = vmatprep.mubr.f32.mxu0 0.0
  %1512 = vmatmul.mubr.f32.gmra.mxu0 %v391
  %v1513 = vpop.f32.mrf.mxu0
  %v1514 = vadd.f32 0.0, %v1513
  %v1515 = vpop.f32.mrf.mxu0
  %1516 = vmatprep.mubr.f32.mxu0 0.0
  %1517 = vmatmul.mubr.f32.gmra.mxu0 %v392
  %v1518 = vpop.f32.mrf.mxu0
  %v1519 = vadd.f32 0.0, %v1518
  %v1520 = vpop.f32.mrf.mxu0
  %1521 = vmatprep.mubr.f32.mxu0 0.0
  %1522 = vmatmul.mubr.f32.gmra.mxu0 %v393
  %v1523 = vpop.f32.mrf.mxu0
  %v1524 = vadd.f32 0.0, %v1523
  %v1525 = vpop.f32.mrf.mxu0
  %1526 = vmatprep.mubr.f32.mxu0 0.0
  %1527 = vmatmul.mubr.f32.gmra.mxu0 %v394
  %v1528 = vpop.f32.mrf.mxu0
  %v1529 = vadd.f32 0.0, %v1528
  %v1530 = vpop.f32.mrf.mxu0
  %1531 = vdwg.mxu0
  %1532 = vmatprep.subr.mxu0 0.0
  %1533 = vmatpush1.msra.mxu0 %v1222
  %1534 = vmatprep.subr.mxu0 0.0
  %1535 = vmatpush1.msra.mxu0 %v1217
  %1536 = vmatprep.subr.mxu0 0.0
  %1537 = vmatpush1.msra.mxu0 %v1212
  %1538 = vmatprep.subr.mxu0 0.0
  %1539 = vmatpush1.msra.mxu0 %v1207
  %1540 = vmatprep.subr.mxu0 0.0
  %1541 = vmatpush1.msra.mxu0 %v1202
  %1542 = vmatprep.subr.mxu0 0.0
  %1543 = vmatpush1.msra.mxu0 %v1197
  %1544 = vmatprep.subr.mxu0 0.0
  %1545 = vmatpush1.msra.mxu0 %v1192
  %1546 = vmatprep.subr.mxu0 0.0
  %1547 = vmatpush1.msra.mxu0 %v1187
  %1548 = vmatprep.subr.mxu0 0.0
  %1549 = vmatpush1.msra.mxu0 %v1182
  %1550 = vmatprep.subr.mxu0 0.0
  %1551 = vmatpush1.msra.mxu0 %v1177
  %1552 = vmatprep.subr.mxu0 0.0
  %1553 = vmatpush1.msra.mxu0 %v1172
  %1554 = vmatprep.subr.mxu0 0.0
  %1555 = vmatpush1.msra.mxu0 %v1167
  %1556 = vmatprep.subr.mxu0 0.0
  %1557 = vmatpush1.msra.mxu0 %v1162
  %1558 = vmatprep.subr.mxu0 0.0
  %1559 = vmatpush1.msra.mxu0 %v1157
  %1560 = vmatprep.subr.mxu0 0.0
  %1561 = vmatpush1.msra.mxu0 %v1152
  %1562 = vmatprep.subr.mxu0 0.0
  %1563 = vmatpush1.msra.mxu0 %v1147
  %1564 = vmatprep.subr.mxu0 0.0
  %1565 = vmatpush2.msra.mxu0 0.0
  %1566 = vmatprep.subr.mxu0 0.0
  %1567 = vmatpush2.msra.mxu0 0.0
  %1568 = vmatprep.subr.mxu0 0.0
  %1569 = vmatpush2.msra.mxu0 0.0
  %1570 = vmatprep.subr.mxu0 0.0
  %1571 = vmatpush2.msra.mxu0 0.0
  %1572 = vmatprep.subr.mxu0 0.0
  %1573 = vmatpush2.msra.mxu0 0.0
  %1574 = vmatprep.subr.mxu0 0.0
  %1575 = vmatpush2.msra.mxu0 0.0
  %1576 = vmatprep.subr.mxu0 0.0
  %1577 = vmatpush2.msra.mxu0 0.0
  %1578 = vmatprep.subr.mxu0 0.0
  %1579 = vmatpush2.msra.mxu0 0.0
  %1580 = vmatprep.subr.mxu0 0.0
  %1581 = vmatpush2.msra.mxu0 0.0
  %1582 = vmatprep.subr.mxu0 0.0
  %1583 = vmatpush2.msra.mxu0 0.0
  %1584 = vmatprep.subr.mxu0 0.0
  %1585 = vmatpush2.msra.mxu0 0.0
  %1586 = vmatprep.subr.mxu0 0.0
  %1587 = vmatpush2.msra.mxu0 0.0
  %1588 = vmatprep.subr.mxu0 0.0
  %1589 = vmatpush2.msra.mxu0 0.0
  %1590 = vmatprep.subr.mxu0 0.0
  %1591 = vmatpush2.msra.mxu0 0.0
  %1592 = vmatprep.subr.mxu0 0.0
  %1593 = vmatpush2.msra.mxu0 0.0
  %1594 = vmatprep.subr.mxu0 0.0
  %1595 = vmatpush2.msra.mxu0 0.0
  %1596 = vmatprep.mubr.f32.mxu0 0.0
  %1597 = vmatmul.mubr.f32.gmra.mxu0 %v200
  %v1598 = vpop.f32.mrf.mxu0
  %v1599 = vadd.f32 %v1454, %v1598
  %v1600 = vpop.f32.mrf.mxu0
  %1601 = vmatprep.mubr.f32.mxu0 0.0
  %1602 = vmatmul.mubr.f32.gmra.mxu0 %v201
  %v1603 = vpop.f32.mrf.mxu0
  %v1604 = vadd.f32 %v1459, %v1603
  %v1605 = vpop.f32.mrf.mxu0
  %1606 = vmatprep.mubr.f32.mxu0 0.0
  %1607 = vmatmul.mubr.f32.gmra.mxu0 %v202
  %v1608 = vpop.f32.mrf.mxu0
  %v1609 = vadd.f32 %v1464, %v1608
  %v1610 = vpop.f32.mrf.mxu0
  %1611 = vmatprep.mubr.f32.mxu0 0.0
  %1612 = vmatmul.mubr.f32.gmra.mxu0 %v203
  %v1613 = vpop.f32.mrf.mxu0
  %v1614 = vadd.f32 %v1469, %v1613
  %v1615 = vpop.f32.mrf.mxu0
  %1616 = vmatprep.mubr.f32.mxu0 0.0
  %1617 = vmatmul.mubr.f32.gmra.mxu0 %v204
  %v1618 = vpop.f32.mrf.mxu0
  %v1619 = vadd.f32 %v1474, %v1618
  %v1620 = vpop.f32.mrf.mxu0
  %1621 = vmatprep.mubr.f32.mxu0 0.0
  %1622 = vmatmul.mubr.f32.gmra.mxu0 %v205
  %v1623 = vpop.f32.mrf.mxu0
  %v1624 = vadd.f32 %v1479, %v1623
  %v1625 = vpop.f32.mrf.mxu0
  %1626 = vmatprep.mubr.f32.mxu0 0.0
  %1627 = vmatmul.mubr.f32.gmra.mxu0 %v206
  %v1628 = vpop.f32.mrf.mxu0
  %v1629 = vadd.f32 %v1484, %v1628
  %v1630 = vpop.f32.mrf.mxu0
  %1631 = vmatprep.mubr.f32.mxu0 0.0
  %1632 = vmatmul.mubr.f32.gmra.mxu0 %v207
  %v1633 = vpop.f32.mrf.mxu0
  %v1634 = vadd.f32 %v1489, %v1633
  %v1635 = vpop.f32.mrf.mxu0
  %1636 = vmatprep.mubr.f32.mxu0 0.0
  %1637 = vmatmul.mubr.f32.gmra.mxu0 %v208
  %v1638 = vpop.f32.mrf.mxu0
  %v1639 = vadd.f32 %v1494, %v1638
  %v1640 = vpop.f32.mrf.mxu0
  %1641 = vmatprep.mubr.f32.mxu0 0.0
  %1642 = vmatmul.mubr.f32.gmra.mxu0 %v209
  %v1643 = vpop.f32.mrf.mxu0
  %v1644 = vadd.f32 %v1499, %v1643
  %v1645 = vpop.f32.mrf.mxu0
  %1646 = vmatprep.mubr.f32.mxu0 0.0
  %1647 = vmatmul.mubr.f32.gmra.mxu0 %v210
  %v1648 = vpop.f32.mrf.mxu0
  %v1649 = vadd.f32 %v1504, %v1648
  %v1650 = vpop.f32.mrf.mxu0
  %1651 = vmatprep.mubr.f32.mxu0 0.0
  %1652 = vmatmul.mubr.f32.gmra.mxu0 %v211
  %v1653 = vpop.f32.mrf.mxu0
  %v1654 = vadd.f32 %v1509, %v1653
  %v1655 = vpop.f32.mrf.mxu0
  %1656 = vmatprep.mubr.f32.mxu0 0.0
  %1657 = vmatmul.mubr.f32.gmra.mxu0 %v212
  %v1658 = vpop.f32.mrf.mxu0
  %v1659 = vadd.f32 %v1514, %v1658
  %v1660 = vpop.f32.mrf.mxu0
  %1661 = vmatprep.mubr.f32.mxu0 0.0
  %1662 = vmatmul.mubr.f32.gmra.mxu0 %v213
  %v1663 = vpop.f32.mrf.mxu0
  %v1664 = vadd.f32 %v1519, %v1663
  %v1665 = vpop.f32.mrf.mxu0
  %1666 = vmatprep.mubr.f32.mxu0 0.0
  %1667 = vmatmul.mubr.f32.gmra.mxu0 %v214
  %v1668 = vpop.f32.mrf.mxu0
  %v1669 = vadd.f32 %v1524, %v1668
  %v1670 = vpop.f32.mrf.mxu0
  %1671 = vmatprep.mubr.f32.mxu0 0.0
  %1672 = vmatmul.mubr.f32.gmra.mxu0 %v215
  %v1673 = vpop.f32.mrf.mxu0
  %v1674 = vadd.f32 %v1529, %v1673
  %v1675 = vpop.f32.mrf.mxu0
  %1676 = vdwg.mxu0
  %s1677 = scalar_lea.vmem %s4, 256
  %v1678 = vld [vmem:[%s1677] sm:$0xff]
  %v1679 = vld [vmem:[%s1677 + $0x8] sm:$0xff]
  %v1680 = vld [vmem:[%s1677 + $0x10] sm:$0xff]
  %v1681 = vld [vmem:[%s1677 + $0x18] sm:$0xff]
  %v1682 = vld [vmem:[%s1677 + $0x20] sm:$0xff]
  %v1683 = vld [vmem:[%s1677 + $0x28] sm:$0xff]
  %v1684 = vld [vmem:[%s1677 + $0x30] sm:$0xff]
  %v1685 = vld [vmem:[%s1677 + $0x38] sm:$0xff]
  %v1686 = vld [vmem:[%s1677 + $0x40] sm:$0xff]
  %v1687 = vld [vmem:[%s1677 + $0x48] sm:$0xff]
  %v1688 = vld [vmem:[%s1677 + $0x50] sm:$0xff]
  %v1689 = vld [vmem:[%s1677 + $0x58] sm:$0xff]
  %v1690 = vld [vmem:[%s1677 + $0x60] sm:$0xff]
  %v1691 = vld [vmem:[%s1677 + $0x68] sm:$0xff]
  %v1692 = vld [vmem:[%s1677 + $0x70] sm:$0xff]
  %v1693 = vld [vmem:[%s1677 + $0x78] sm:$0xff]
  %1694 = vmatprep.subr.mxu0 0.0
  %1695 = vmatpush1.msra.mxu0 %v1693
  %1696 = vmatprep.subr.mxu0 0.0
  %1697 = vmatpush1.msra.mxu0 %v1692
  %1698 = vmatprep.subr.mxu0 0.0
  %1699 = vmatpush1.msra.mxu0 %v1691
  %1700 = vmatprep.subr.mxu0 0.0
  %1701 = vmatpush1.msra.mxu0 %v1690
  %1702 = vmatprep.subr.mxu0 0.0
  %1703 = vmatpush1.msra.mxu0 %v1689
  %1704 = vmatprep.subr.mxu0 0.0
  %1705 = vmatpush1.msra.mxu0 %v1688
  %1706 = vmatprep.subr.mxu0 0.0
  %1707 = vmatpush1.msra.mxu0 %v1687
  %1708 = vmatprep.subr.mxu0 0.0
  %1709 = vmatpush1.msra.mxu0 %v1686
  %1710 = vmatprep.subr.mxu0 0.0
  %1711 = vmatpush1.msra.mxu0 %v1685
  %1712 = vmatprep.subr.mxu0 0.0
  %1713 = vmatpush1.msra.mxu0 %v1684
  %1714 = vmatprep.subr.mxu0 0.0
  %1715 = vmatpush1.msra.mxu0 %v1683
  %1716 = vmatprep.subr.mxu0 0.0
  %1717 = vmatpush1.msra.mxu0 %v1682
  %1718 = vmatprep.subr.mxu0 0.0
  %1719 = vmatpush1.msra.mxu0 %v1681
  %1720 = vmatprep.subr.mxu0 0.0
  %1721 = vmatpush1.msra.mxu0 %v1680
  %1722 = vmatprep.subr.mxu0 0.0
  %1723 = vmatpush1.msra.mxu0 %v1679
  %1724 = vmatprep.subr.mxu0 0.0
  %1725 = vmatpush1.msra.mxu0 %v1678
  %1726 = vmatprep.subr.mxu0 0.0
  %1727 = vmatpush2.msra.mxu0 0.0
  %1728 = vmatprep.subr.mxu0 0.0
  %1729 = vmatpush2.msra.mxu0 0.0
  %1730 = vmatprep.subr.mxu0 0.0
  %1731 = vmatpush2.msra.mxu0 0.0
  %1732 = vmatprep.subr.mxu0 0.0
  %1733 = vmatpush2.msra.mxu0 0.0
  %1734 = vmatprep.subr.mxu0 0.0
  %1735 = vmatpush2.msra.mxu0 0.0
  %1736 = vmatprep.subr.mxu0 0.0
  %1737 = vmatpush2.msra.mxu0 0.0
  %1738 = vmatprep.subr.mxu0 0.0
  %1739 = vmatpush2.msra.mxu0 0.0
  %1740 = vmatprep.subr.mxu0 0.0
  %1741 = vmatpush2.msra.mxu0 0.0
  %1742 = vmatprep.subr.mxu0 0.0
  %1743 = vmatpush2.msra.mxu0 0.0
  %1744 = vmatprep.subr.mxu0 0.0
  %1745 = vmatpush2.msra.mxu0 0.0
  %1746 = vmatprep.subr.mxu0 0.0
  %1747 = vmatpush2.msra.mxu0 0.0
  %1748 = vmatprep.subr.mxu0 0.0
  %1749 = vmatpush2.msra.mxu0 0.0
  %1750 = vmatprep.subr.mxu0 0.0
  %1751 = vmatpush2.msra.mxu0 0.0
  %1752 = vmatprep.subr.mxu0 0.0
  %1753 = vmatpush2.msra.mxu0 0.0
  %1754 = vmatprep.subr.mxu0 0.0
  %1755 = vmatpush2.msra.mxu0 0.0
  %1756 = vmatprep.subr.mxu0 0.0
  %1757 = vmatpush2.msra.mxu0 0.0
  %1758 = vmatprep.mubr.f32.mxu0 0.0
  %1759 = vmatmul.mubr.f32.gmra.mxu0 %v1048
  %v1760 = vpop.f32.mrf.mxu0
  %v1761 = vadd.f32 0.0, %v1760
  %v1762 = vpop.f32.mrf.mxu0
  %1763 = vmatprep.mubr.f32.mxu0 0.0
  %1764 = vmatmul.mubr.f32.gmra.mxu0 %v1049
  %v1765 = vpop.f32.mrf.mxu0
  %v1766 = vadd.f32 0.0, %v1765
  %v1767 = vpop.f32.mrf.mxu0
  %1768 = vmatprep.mubr.f32.mxu0 0.0
  %1769 = vmatmul.mubr.f32.gmra.mxu0 %v1050
  %v1770 = vpop.f32.mrf.mxu0
  %v1771 = vadd.f32 0.0, %v1770
  %v1772 = vpop.f32.mrf.mxu0
  %1773 = vmatprep.mubr.f32.mxu0 0.0
  %1774 = vmatmul.mubr.f32.gmra.mxu0 %v1051
  %v1775 = vpop.f32.mrf.mxu0
  %v1776 = vadd.f32 0.0, %v1775
  %v1777 = vpop.f32.mrf.mxu0
  %1778 = vmatprep.mubr.f32.mxu0 0.0
  %1779 = vmatmul.mubr.f32.gmra.mxu0 %v1052
  %v1780 = vpop.f32.mrf.mxu0
  %v1781 = vadd.f32 0.0, %v1780
  %v1782 = vpop.f32.mrf.mxu0
  %1783 = vmatprep.mubr.f32.mxu0 0.0
  %1784 = vmatmul.mubr.f32.gmra.mxu0 %v1053
  %v1785 = vpop.f32.mrf.mxu0
  %v1786 = vadd.f32 0.0, %v1785
  %v1787 = vpop.f32.mrf.mxu0
  %1788 = vmatprep.mubr.f32.mxu0 0.0
  %1789 = vmatmul.mubr.f32.gmra.mxu0 %v1054
  %v1790 = vpop.f32.mrf.mxu0
  %v1791 = vadd.f32 0.0, %v1790
  %v1792 = vpop.f32.mrf.mxu0
  %1793 = vmatprep.mubr.f32.mxu0 0.0
  %1794 = vmatmul.mubr.f32.gmra.mxu0 %v1055
  %v1795 = vpop.f32.mrf.mxu0
  %v1796 = vadd.f32 0.0, %v1795
  %v1797 = vpop.f32.mrf.mxu0
  %1798 = vmatprep.mubr.f32.mxu0 0.0
  %1799 = vmatmul.mubr.f32.gmra.mxu0 %v1056
  %v1800 = vpop.f32.mrf.mxu0
  %v1801 = vadd.f32 0.0, %v1800
  %v1802 = vpop.f32.mrf.mxu0
  %1803 = vmatprep.mubr.f32.mxu0 0.0
  %1804 = vmatmul.mubr.f32.gmra.mxu0 %v1057
  %v1805 = vpop.f32.mrf.mxu0
  %v1806 = vadd.f32 0.0, %v1805
  %v1807 = vpop.f32.mrf.mxu0
  %1808 = vmatprep.mubr.f32.mxu0 0.0
  %1809 = vmatmul.mubr.f32.gmra.mxu0 %v1058
  %v1810 = vpop.f32.mrf.mxu0
  %v1811 = vadd.f32 0.0, %v1810
  %v1812 = vpop.f32.mrf.mxu0
  %1813 = vmatprep.mubr.f32.mxu0 0.0
  %1814 = vmatmul.mubr.f32.gmra.mxu0 %v1059
  %v1815 = vpop.f32.mrf.mxu0
  %v1816 = vadd.f32 0.0, %v1815
  %v1817 = vpop.f32.mrf.mxu0
  %1818 = vmatprep.mubr.f32.mxu0 0.0
  %1819 = vmatmul.mubr.f32.gmra.mxu0 %v1060
  %v1820 = vpop.f32.mrf.mxu0
  %v1821 = vadd.f32 0.0, %v1820
  %v1822 = vpop.f32.mrf.mxu0
  %1823 = vmatprep.mubr.f32.mxu0 0.0
  %1824 = vmatmul.mubr.f32.gmra.mxu0 %v1061
  %v1825 = vpop.f32.mrf.mxu0
  %v1826 = vadd.f32 0.0, %v1825
  %v1827 = vpop.f32.mrf.mxu0
  %1828 = vmatprep.mubr.f32.mxu0 0.0
  %1829 = vmatmul.mubr.f32.gmra.mxu0 %v1062
  %v1830 = vpop.f32.mrf.mxu0
  %v1831 = vadd.f32 0.0, %v1830
  %v1832 = vpop.f32.mrf.mxu0
  %1833 = vmatprep.mubr.f32.mxu0 0.0
  %1834 = vmatmul.mubr.f32.gmra.mxu0 %v1063
  %v1835 = vpop.f32.mrf.mxu0
  %v1836 = vadd.f32 0.0, %v1835
  %v1837 = vpop.f32.mrf.mxu0
  %1838 = vdwg.mxu0
  %1839 = vmatprep.subr.mxu0 0.0
  %1840 = vmatpush1.msra.mxu0 %v1836
  %1841 = vmatprep.subr.mxu0 0.0
  %1842 = vmatpush1.msra.mxu0 %v1831
  %1843 = vmatprep.subr.mxu0 0.0
  %1844 = vmatpush1.msra.mxu0 %v1826
  %1845 = vmatprep.subr.mxu0 0.0
  %1846 = vmatpush1.msra.mxu0 %v1821
  %1847 = vmatprep.subr.mxu0 0.0
  %1848 = vmatpush1.msra.mxu0 %v1816
  %1849 = vmatprep.subr.mxu0 0.0
  %1850 = vmatpush1.msra.mxu0 %v1811
  %1851 = vmatprep.subr.mxu0 0.0
  %1852 = vmatpush1.msra.mxu0 %v1806
  %1853 = vmatprep.subr.mxu0 0.0
  %1854 = vmatpush1.msra.mxu0 %v1801
  %1855 = vmatprep.subr.mxu0 0.0
  %1856 = vmatpush1.msra.mxu0 %v1796
  %1857 = vmatprep.subr.mxu0 0.0
  %1858 = vmatpush1.msra.mxu0 %v1791
  %1859 = vmatprep.subr.mxu0 0.0
  %1860 = vmatpush1.msra.mxu0 %v1786
  %1861 = vmatprep.subr.mxu0 0.0
  %1862 = vmatpush1.msra.mxu0 %v1781
  %1863 = vmatprep.subr.mxu0 0.0
  %1864 = vmatpush1.msra.mxu0 %v1776
  %1865 = vmatprep.subr.mxu0 0.0
  %1866 = vmatpush1.msra.mxu0 %v1771
  %1867 = vmatprep.subr.mxu0 0.0
  %1868 = vmatpush1.msra.mxu0 %v1766
  %1869 = vmatprep.subr.mxu0 0.0
  %1870 = vmatpush1.msra.mxu0 %v1761
  %1871 = vmatprep.subr.mxu0 0.0
  %1872 = vmatpush2.msra.mxu0 0.0
  %1873 = vmatprep.subr.mxu0 0.0
  %1874 = vmatpush2.msra.mxu0 0.0
  %1875 = vmatprep.subr.mxu0 0.0
  %1876 = vmatpush2.msra.mxu0 0.0
  %1877 = vmatprep.subr.mxu0 0.0
  %1878 = vmatpush2.msra.mxu0 0.0
  %1879 = vmatprep.subr.mxu0 0.0
  %1880 = vmatpush2.msra.mxu0 0.0
  %1881 = vmatprep.subr.mxu0 0.0
  %1882 = vmatpush2.msra.mxu0 0.0
  %1883 = vmatprep.subr.mxu0 0.0
  %1884 = vmatpush2.msra.mxu0 0.0
  %1885 = vmatprep.subr.mxu0 0.0
  %1886 = vmatpush2.msra.mxu0 0.0
  %1887 = vmatprep.subr.mxu0 0.0
  %1888 = vmatpush2.msra.mxu0 0.0
  %1889 = vmatprep.subr.mxu0 0.0
  %1890 = vmatpush2.msra.mxu0 0.0
  %1891 = vmatprep.subr.mxu0 0.0
  %1892 = vmatpush2.msra.mxu0 0.0
  %1893 = vmatprep.subr.mxu0 0.0
  %1894 = vmatpush2.msra.mxu0 0.0
  %1895 = vmatprep.subr.mxu0 0.0
  %1896 = vmatpush2.msra.mxu0 0.0
  %1897 = vmatprep.subr.mxu0 0.0
  %1898 = vmatpush2.msra.mxu0 0.0
  %1899 = vmatprep.subr.mxu0 0.0
  %1900 = vmatpush2.msra.mxu0 0.0
  %1901 = vmatprep.subr.mxu0 0.0
  %1902 = vmatpush2.msra.mxu0 0.0
  %1903 = vmatprep.mubr.f32.mxu0 0.0
  %1904 = vmatmul.mubr.f32.gmra.mxu0 %v848
  %v1905 = vpop.f32.mrf.mxu0
  %v1906 = vadd.f32 0.0, %v1905
  %v1907 = vpop.f32.mrf.mxu0
  %1908 = vmatprep.mubr.f32.mxu0 0.0
  %1909 = vmatmul.mubr.f32.gmra.mxu0 %v849
  %v1910 = vpop.f32.mrf.mxu0
  %v1911 = vadd.f32 0.0, %v1910
  %v1912 = vpop.f32.mrf.mxu0
  %1913 = vmatprep.mubr.f32.mxu0 0.0
  %1914 = vmatmul.mubr.f32.gmra.mxu0 %v850
  %v1915 = vpop.f32.mrf.mxu0
  %v1916 = vadd.f32 0.0, %v1915
  %v1917 = vpop.f32.mrf.mxu0
  %1918 = vmatprep.mubr.f32.mxu0 0.0
  %1919 = vmatmul.mubr.f32.gmra.mxu0 %v851
  %v1920 = vpop.f32.mrf.mxu0
  %v1921 = vadd.f32 0.0, %v1920
  %v1922 = vpop.f32.mrf.mxu0
  %1923 = vmatprep.mubr.f32.mxu0 0.0
  %1924 = vmatmul.mubr.f32.gmra.mxu0 %v852
  %v1925 = vpop.f32.mrf.mxu0
  %v1926 = vadd.f32 0.0, %v1925
  %v1927 = vpop.f32.mrf.mxu0
  %1928 = vmatprep.mubr.f32.mxu0 0.0
  %1929 = vmatmul.mubr.f32.gmra.mxu0 %v853
  %v1930 = vpop.f32.mrf.mxu0
  %v1931 = vadd.f32 0.0, %v1930
  %v1932 = vpop.f32.mrf.mxu0
  %1933 = vmatprep.mubr.f32.mxu0 0.0
  %1934 = vmatmul.mubr.f32.gmra.mxu0 %v854
  %v1935 = vpop.f32.mrf.mxu0
  %v1936 = vadd.f32 0.0, %v1935
  %v1937 = vpop.f32.mrf.mxu0
  %1938 = vmatprep.mubr.f32.mxu0 0.0
  %1939 = vmatmul.mubr.f32.gmra.mxu0 %v855
  %v1940 = vpop.f32.mrf.mxu0
  %v1941 = vadd.f32 0.0, %v1940
  %v1942 = vpop.f32.mrf.mxu0
  %1943 = vmatprep.mubr.f32.mxu0 0.0
  %1944 = vmatmul.mubr.f32.gmra.mxu0 %v856
  %v1945 = vpop.f32.mrf.mxu0
  %v1946 = vadd.f32 0.0, %v1945
  %v1947 = vpop.f32.mrf.mxu0
  %1948 = vmatprep.mubr.f32.mxu0 0.0
  %1949 = vmatmul.mubr.f32.gmra.mxu0 %v857
  %v1950 = vpop.f32.mrf.mxu0
  %v1951 = vadd.f32 0.0, %v1950
  %v1952 = vpop.f32.mrf.mxu0
  %1953 = vmatprep.mubr.f32.mxu0 0.0
  %1954 = vmatmul.mubr.f32.gmra.mxu0 %v858
  %v1955 = vpop.f32.mrf.mxu0
  %v1956 = vadd.f32 0.0, %v1955
  %v1957 = vpop.f32.mrf.mxu0
  %1958 = vmatprep.mubr.f32.mxu0 0.0
  %1959 = vmatmul.mubr.f32.gmra.mxu0 %v859
  %v1960 = vpop.f32.mrf.mxu0
  %v1961 = vadd.f32 0.0, %v1960
  %v1962 = vpop.f32.mrf.mxu0
  %1963 = vmatprep.mubr.f32.mxu0 0.0
  %1964 = vmatmul.mubr.f32.gmra.mxu0 %v860
  %v1965 = vpop.f32.mrf.mxu0
  %v1966 = vadd.f32 0.0, %v1965
  %v1967 = vpop.f32.mrf.mxu0
  %1968 = vmatprep.mubr.f32.mxu0 0.0
  %1969 = vmatmul.mubr.f32.gmra.mxu0 %v861
  %v1970 = vpop.f32.mrf.mxu0
  %v1971 = vadd.f32 0.0, %v1970
  %v1972 = vpop.f32.mrf.mxu0
  %1973 = vmatprep.mubr.f32.mxu0 0.0
  %1974 = vmatmul.mubr.f32.gmra.mxu0 %v862
  %v1975 = vpop.f32.mrf.mxu0
  %v1976 = vadd.f32 0.0, %v1975
  %v1977 = vpop.f32.mrf.mxu0
  %1978 = vmatprep.mubr.f32.mxu0 0.0
  %1979 = vmatmul.mubr.f32.gmra.mxu0 %v863
  %v1980 = vpop.f32.mrf.mxu0
  %v1981 = vadd.f32 0.0, %v1980
  %v1982 = vpop.f32.mrf.mxu0
  %1983 = vdwg.mxu0
  %v1984 = vadd.f32 %v1599, %v1906
  %v1985 = vadd.f32 %v1604, %v1911
  %v1986 = vadd.f32 %v1609, %v1916
  %v1987 = vadd.f32 %v1614, %v1921
  %v1988 = vadd.f32 %v1619, %v1926
  %v1989 = vadd.f32 %v1624, %v1931
  %v1990 = vadd.f32 %v1629, %v1936
  %v1991 = vadd.f32 %v1634, %v1941
  %v1992 = vadd.f32 %v1639, %v1946
  %v1993 = vadd.f32 %v1644, %v1951
  %v1994 = vadd.f32 %v1649, %v1956
  %v1995 = vadd.f32 %v1654, %v1961
  %v1996 = vadd.f32 %v1659, %v1966
  %v1997 = vadd.f32 %v1664, %v1971
  %v1998 = vadd.f32 %v1669, %v1976
  %v1999 = vadd.f32 %v1674, %v1981
  %v2000 = vld [vmem:[%s5] sm:$0x1]
  %v2002 = vlaneseq
  %v2003 = vshrl.u32 %v2002, 7
  %v2004 = vsub.s32 0, %v2003
  %v2005 = vrot.slane %v2000, %v2004
  %v2007 = vadd.f32 %v1984, %v2005
  %v2008 = vadd.f32 %v1985, %v2005
  %v2009 = vadd.f32 %v1986, %v2005
  %v2010 = vadd.f32 %v1987, %v2005
  %v2011 = vadd.f32 %v1988, %v2005
  %v2012 = vadd.f32 %v1989, %v2005
  %v2013 = vadd.f32 %v1990, %v2005
  %v2014 = vadd.f32 %v1991, %v2005
  %v2015 = vadd.f32 %v1992, %v2005
  %v2016 = vadd.f32 %v1993, %v2005
  %v2017 = vadd.f32 %v1994, %v2005
  %v2018 = vadd.f32 %v1995, %v2005
  %v2019 = vadd.f32 %v1996, %v2005
  %v2020 = vadd.f32 %v1997, %v2005
  %v2021 = vadd.f32 %v1998, %v2005
  %v2022 = vadd.f32 %v1999, %v2005
  %2023 = vst [vmem:[%s6] sm:$0xff] %v2007
  %2024 = vst [vmem:[%s6 + $0x8] sm:$0xff] %v2008
  %2025 = vst [vmem:[%s6 + $0x10] sm:$0xff] %v2009
  %2026 = vst [vmem:[%s6 + $0x18] sm:$0xff] %v2010
  %2027 = vst [vmem:[%s6 + $0x20] sm:$0xff] %v2011
  %2028 = vst [vmem:[%s6 + $0x28] sm:$0xff] %v2012
  %2029 = vst [vmem:[%s6 + $0x30] sm:$0xff] %v2013
  %2030 = vst [vmem:[%s6 + $0x38] sm:$0xff] %v2014
  %2031 = vst [vmem:[%s6 + $0x40] sm:$0xff] %v2015
  %2032 = vst [vmem:[%s6 + $0x48] sm:$0xff] %v2016
  %2033 = vst [vmem:[%s6 + $0x50] sm:$0xff] %v2017
  %2034 = vst [vmem:[%s6 + $0x58] sm:$0xff] %v2018
  %2035 = vst [vmem:[%s6 + $0x60] sm:$0xff] %v2019
  %2036 = vst [vmem:[%s6 + $0x68] sm:$0xff] %v2020
  %2037 = vst [vmem:[%s6 + $0x70] sm:$0xff] %v2021
  %2038 = vst [vmem:[%s6 + $0x78] sm:$0xff] %v2022
  // Predicated region
  $region26: #{hetero_gnn_forward.1} parent=0 // pred_check
    _
  $region27: #{hetero_gnn_forward.1} parent=0 // pred_check_branch
    %2040 = sbr.rel (0) target = $region29
  $region28: #{hetero_gnn_forward.1} parent=0 // pred_region
    _
  $region29: #{hetero_gnn_forward.1} parent=0 // pred_fallthru
    _
  // Predicated region
  $region30: #{hetero_gnn_forward.1} parent=0 // pred_check
    _
  $region31: #{hetero_gnn_forward.1} parent=0 // pred_check_branch
    %2042 = sbr.rel (0) target = $region33
  $region32: #{hetero_gnn_forward.1} parent=0 // pred_region
    _
  $region33: #{hetero_gnn_forward.1} parent=0 // pred_fallthru
    _

</llo_original>
